<compile_context>
chip_gen: v7x
topology: tpu7x:2x2x1
jax: 0.10.0
libtpu: 0.0.40
codegen_flags: <defaults>
</compile_context>

<pallas_src>
import numpy as np
import jax
import jax.numpy as jnp
from jax.experimental import pallas as pl
from jax.experimental.pallas import tpu as pltpu

PAD = 0


def _round_up(x, m):
    return (x + m - 1) // m * m


# ----------------------------------------------------------------------------
# Kernel 1: GRU recurrence, single grid step.
#   emb:  (Ls, B, HP)  lane-padded embeddings, resident in VMEM
#   h0 :  (B, HP)      lane-padded initial hidden
#   wih/whh: (HP, GP)  fused gate weights, gate g at lane block [g*HP, g*HP+H)
#   bih/bhh: (1, GP)
#   h_out:  (B, HP)    final hidden (padding lanes stay 0)
#   gi_scratch: (Ls, B, GP) VMEM scratch holding the precomputed input-side gates
# ----------------------------------------------------------------------------
def _gru_recurrence_kernel(emb_ref, h0_ref, wih_ref, whh_ref, bih_ref, bhh_ref,
                           h_out_ref, gi_scratch):
    Ls, B, HP = emb_ref.shape
    wih = wih_ref[...]
    whh = whh_ref[...]
    bih = bih_ref[...]
    bhh = bhh_ref[...]

    # Hoisted input-side gate matmuls (independent of h): all Ls timesteps computed
    # up-front, off the serial recurrence path.  Static loop -> static ref stores.
    for t in range(Ls):
        gi_scratch[t] = (
            jnp.dot(emb_ref[t], wih, preferred_element_type=jnp.float32) + bih)

    def step(t, h):
        gi = gi_scratch[t]                                          # (B, GP), dynamic t
        gh = jnp.dot(h, whh, preferred_element_type=jnp.float32) + bhh
        # 128-lane-aligned gate slices (whole-vreg views): order r, z, n (PyTorch).
        r = jax.nn.sigmoid(gi[:, 0:HP] + gh[:, 0:HP])
        z = jax.nn.sigmoid(gi[:, HP:2 * HP] + gh[:, HP:2 * HP])
        n = jnp.tanh(gi[:, 2 * HP:3 * HP] + r * gh[:, 2 * HP:3 * HP])
        return n + z * (h - n)                                       # == (1-z)*n + z*h

    h_out_ref[...] = jax.lax.fori_loop(0, Ls, step, h0_ref[...], unroll=True)


# ----------------------------------------------------------------------------
# Kernel 2: output projection, tiled over the lane-padded vocab dim.
#   cat([h, attn]) @ W_out.T + b  ==  h @ Wo_h + attn @ Wo_a + b   (no concat needed)
# ----------------------------------------------------------------------------
def _output_proj_kernel(h_ref, attn_ref, wo_h_ref, wo_a_ref, bo_ref, out_ref):
    out_ref[...] = (
        jnp.dot(h_ref[...], wo_h_ref[...], preferred_element_type=jnp.float32)
        + jnp.dot(attn_ref[...], wo_a_ref[...], preferred_element_type=jnp.float32)
        + bo_ref[...])


# ----------------------------------------------------------------------------
# Parameters (PyTorch layouts) + one-time kernel-layout preparation.
# ----------------------------------------------------------------------------
def init_decoder_params(key, hidden_size, output_size):
    H, O = hidden_size, output_size
    keys = jax.random.split(key, 7)

    def u(k, shape, scale):
        return jax.random.uniform(k, shape, jnp.float32, -scale, scale)

    s_gru = 1.0 / np.sqrt(H)
    s_out = 1.0 / np.sqrt(2 * H)
    return {
        'emb':     u(keys[0], (O, H), 1.0).at[PAD].set(0.0),   # padding_idx=PAD
        'gru_wih': u(keys[1], (3 * H, H), s_gru),              # gates r, z, n (PyTorch)
        'gru_whh': u(keys[2], (3 * H, H), s_gru),
        'gru_bih': u(keys[3], (3 * H,), s_gru),
        'gru_bhh': u(keys[4], (3 * H,), s_gru),
        'out_w':   u(keys[5], (O, 2 * H), s_out),              # nn.Linear(2H, O)
        'out_b':   u(keys[6], (O,), s_out),
    }


def prepare_decoder_params(raw):
    """Transpose / lane-pad weights once, outside the hot path.

    Gate layout: HP = round_up(H,128); fused gate dim GP = 3*HP; gate g's real
    columns live at lanes [g*HP, g*HP+H), the rest are zero (so padding lanes of
    the carried hidden state stay exactly zero through every step).
    """
    H = raw['gru_whh'].shape[1]
    O = raw['out_w'].shape[0]
    HP = _round_up(H, 128)
    GP = 3 * HP
    OP = _round_up(O, 128)

    def pad_to(a, shape):
        return jnp.pad(a, [(0, s - d) for s, d in zip(shape, a.shape)])

    def fuse_gate_weights(w):                      # w: (3H, H) PyTorch layout
        w_t = w.T                                  # (H, 3H), gate g cols [g*H,(g+1)*H)
        out = jnp.zeros((HP, GP), jnp.float32)
        for g in range(3):
            out = out.at[:H, g * HP:g * HP + H].set(w_t[:, g * H:(g + 1) * H])
        return out

    def fuse_gate_bias(b):                         # b: (3H,)
        out = jnp.zeros((1, GP), jnp.float32)
        for g in range(3):
            out = out.at[0, g * HP:g * HP + H].set(b[g * H:(g + 1) * H])
        return out

    w_out_t = raw['out_w'].T                       # (2H, O)
    return {
        'emb':   pad_to(raw['emb'], (O, HP)),                  # (O, HP)
        'wih_t': fuse_gate_weights(raw['gru_wih']),            # (HP, GP)
        'whh_t': fuse_gate_weights(raw['gru_whh']),            # (HP, GP)
        'bih':   fuse_gate_bias(raw['gru_bih']),               # (1, GP)
        'bhh':   fuse_gate_bias(raw['gru_bhh']),               # (1, GP)
        'wo_h':  pad_to(w_out_t[:H], (HP, OP)),                # (HP, OP)
        'wo_a':  pad_to(w_out_t[H:], (HP, OP)),                # (HP, OP)
        'bo':    pad_to(raw['out_b'][None, :], (1, OP)),       # (1, OP)
    }


# ----------------------------------------------------------------------------
# Forward pass (matches torch Decoder.forward semantics).
# ----------------------------------------------------------------------------
def decoder_forward(kparams, seqs, hidden, attn, *, output_size):
    # seqs: (Ls, B) int32 ; hidden, attn: (1, B, H) float32
    Ls, B = seqs.shape
    H = hidden.shape[-1]
    HP = kparams['wih_t'].shape[0]
    GP = kparams['wih_t'].shape[1]
    OP = kparams['bo'].shape[1]
    assert Ls >= 1, "decoder needs at least one input timestep"

    emb = jnp.take(kparams['emb'], seqs, axis=0)               # (Ls, B, HP), lane-padded
    h0 = jnp.pad(hidden[0], ((0, 0), (0, HP - H)))             # (B, HP)
    at = jnp.pad(attn[0], ((0, 0), (0, HP - H)))               # (B, HP)

    # --- GRU recurrence: single grid step, time loop inside the kernel --------
    h_fin = pl.pallas_call(
        _gru_recurrence_kernel,
        grid=(1,),
        in_specs=[
            pl.BlockSpec((Ls, B, HP), lambda i: (0, 0, 0)),    # all timesteps resident
            pl.BlockSpec((B, HP),  lambda i: (0, 0)),          # h0
            pl.BlockSpec((HP, GP), lambda i: (0, 0)),          # fused W_ih^T
            pl.BlockSpec((HP, GP), lambda i: (0, 0)),          # fused W_hh^T
            pl.BlockSpec((1, GP),  lambda i: (0, 0)),          # b_ih
            pl.BlockSpec((1, GP),  lambda i: (0, 0)),          # b_hh
        ],
        out_specs=pl.BlockSpec((B, HP), lambda i: (0, 0)),     # final hidden (lane-padded)
        out_shape=jax.ShapeDtypeStruct((B, HP), jnp.float32),
        scratch_shapes=[pltpu.VMEM((Ls, B, GP), jnp.float32)], # precomputed input gates
        compiler_params=pltpu.CompilerParams(
            dimension_semantics=("arbitrary",)),
    )(emb, h0, kparams['wih_t'], kparams['whh_t'], kparams['bih'], kparams['bhh'])

    # --- Output projection: separate kernel, tiled over the vocab dim ---------
    TO = 128
    logits_p = pl.pallas_call(
        _output_proj_kernel,
        grid=(OP // TO,),
        in_specs=[
            pl.BlockSpec((B, HP),  lambda j: (0, 0)),          # final hidden
            pl.BlockSpec((B, HP),  lambda j: (0, 0)),          # attn
            pl.BlockSpec((HP, TO), lambda j: (0, j)),          # W_out^T (hidden half)
            pl.BlockSpec((HP, TO), lambda j: (0, j)),          # W_out^T (attn half)
            pl.BlockSpec((1, TO),  lambda j: (0, j)),          # b_out
        ],
        out_specs=pl.BlockSpec((B, TO), lambda j: (0, j)),
        out_shape=jax.ShapeDtypeStruct((B, OP), jnp.float32),
        compiler_params=pltpu.CompilerParams(
            dimension_semantics=("parallel",)),
    )(h_fin, at, kparams['wo_h'], kparams['wo_a'], kparams['bo'])

    output = logits_p[:, :output_size][None]                   # (1, B, O)
    hid = h_fin[:, :H][None]                                   # (1, B, H)
    return output, hid


# ----------------------------------------------------------------------------
# Pure-JAX reference (PyTorch GRU / Linear semantics) for correctness checking.
# ----------------------------------------------------------------------------
def decoder_ref(raw, seqs, hidden, attn):
    H = raw['gru_whh'].shape[1]
    emb = jnp.take(raw['emb'], seqs, axis=0)                   # (Ls, B, H)
    h = hidden[0]
    for t in range(seqs.shape[0]):
        x = emb[t]
        gi = x @ raw['gru_wih'].T + raw['gru_bih']
        gh = h @ raw['gru_whh'].T + raw['gru_bhh']
        r = jax.nn.sigmoid(gi[:, :H] + gh[:, :H])
        z = jax.nn.sigmoid(gi[:, H:2 * H] + gh[:, H:2 * H])
        n = jnp.tanh(gi[:, 2 * H:] + r * gh[:, 2 * H:])
        h = (1.0 - z) * n + z * h
    hid = h[None]                                              # (1, B, H)
    out = jnp.concatenate([hid, attn], axis=2) @ raw['out_w'].T + raw['out_b']
    return out, hid


# ----------------------------------------------------------------------------
if __name__ == "__main__":
    key = jax.random.PRNGKey(0)
    kp, ks, kh, ka = jax.random.split(key, 4)

    hidden_size = 32      # H
    output_size = 10      # O (decoder vocab)
    B = 4                 # batch
    Ls = 3                # decoder input sequence length

    raw = init_decoder_params(kp, hidden_size, output_size)
    kparams = prepare_decoder_params(raw)

    seqs = jax.random.randint(ks, (Ls, B), 1, output_size, dtype=jnp.int32)
    hidden0 = jax.random.uniform(kh, (1, B, hidden_size), jnp.float32, -1.0, 1.0)
    attn = jax.random.uniform(ka, (1, B, hidden_size), jnp.float32, -1.0, 1.0)

    fwd = jax.jit(decoder_forward, static_argnames=('output_size',))
    out, hid = fwd(kparams, seqs, hidden0, attn, output_size=output_size)
    out, hid = jax.block_until_ready((out, hid))

    assert out.shape == (1, B, output_size), out.shape
    assert hid.shape == (1, B, hidden_size), hid.shape
    assert bool(jnp.all(jnp.isfinite(out))) and bool(jnp.all(jnp.isfinite(hid)))

    ref_out, ref_hid = decoder_ref(raw, seqs, hidden0, attn)
    np.testing.assert_allclose(np.asarray(out), np.asarray(ref_out), rtol=1e-2, atol=1e-2)
    np.testing.assert_allclose(np.asarray(hid), np.asarray(ref_hid), rtol=1e-2, atol=1e-2)

    print("KERNEL_OK")
</pallas_src>

<mosaic_0001>
module attributes {stable_mosaic.version = 11 : i64} {
  func.func @_gru_recurrence_kernel(%arg0: i32, %arg1: memref<3x4x128xf32, #tpu.memory_space<vmem>>, %arg2: memref<4x128xf32, #tpu.memory_space<vmem>>, %arg3: memref<128x384xf32, #tpu.memory_space<vmem>>, %arg4: memref<128x384xf32, #tpu.memory_space<vmem>>, %arg5: memref<1x384xf32, #tpu.memory_space<vmem>>, %arg6: memref<1x384xf32, #tpu.memory_space<vmem>>, %arg7: memref<4x128xf32, #tpu.memory_space<vmem>>, %arg8: memref<3x4x384xf32, #tpu.memory_space<vmem>>) attributes {dimension_semantics = [#tpu.dimension_semantics<arbitrary>], iteration_bounds = array<i64: 1>, scalar_prefetch = 0 : i64, scratch_operands = 1 : i64, tpu.core_type = #tpu.core_type<tc>, window_params = [{pipeline_mode = #tpu.pipeline_mode<synchronous>, transform_indices = @transform_0, window_bounds = array<i64: 3, 4, 128>}, {pipeline_mode = #tpu.pipeline_mode<synchronous>, transform_indices = @transform_1, window_bounds = array<i64: 4, 128>}, {pipeline_mode = #tpu.pipeline_mode<synchronous>, transform_indices = @transform_2, window_bounds = array<i64: 128, 384>}, {pipeline_mode = #tpu.pipeline_mode<synchronous>, transform_indices = @transform_3, window_bounds = array<i64: 128, 384>}, {pipeline_mode = #tpu.pipeline_mode<synchronous>, transform_indices = @transform_4, window_bounds = array<i64: 1, 384>}, {pipeline_mode = #tpu.pipeline_mode<synchronous>, transform_indices = @transform_5, window_bounds = array<i64: 1, 384>}, {pipeline_mode = #tpu.pipeline_mode<synchronous>, transform_indices = @transform_6, window_bounds = array<i64: 4, 128>}]} {
    %c0 = arith.constant 0 : index
    %c0_0 = arith.constant 0 : index
    %0 = vector.load %arg3[%c0, %c0_0] : memref<128x384xf32, #tpu.memory_space<vmem>>, vector<128x384xf32>
    %c0_1 = arith.constant 0 : index
    %c0_2 = arith.constant 0 : index
    %1 = vector.load %arg4[%c0_1, %c0_2] : memref<128x384xf32, #tpu.memory_space<vmem>>, vector<128x384xf32>
    %c0_3 = arith.constant 0 : index
    %c0_4 = arith.constant 0 : index
    %2 = vector.load %arg5[%c0_3, %c0_4] : memref<1x384xf32, #tpu.memory_space<vmem>>, vector<1x384xf32>
    %c0_5 = arith.constant 0 : index
    %c0_6 = arith.constant 0 : index
    %3 = vector.load %arg6[%c0_5, %c0_6] : memref<1x384xf32, #tpu.memory_space<vmem>>, vector<1x384xf32>
    %c0_7 = arith.constant 0 : index
    %c0_8 = arith.constant 0 : index
    %c0_9 = arith.constant 0 : index
    %4 = vector.load %arg1[%c0_7, %c0_8, %c0_9] : memref<3x4x128xf32, #tpu.memory_space<vmem>>, vector<1x4x128xf32>
    %5 = vector.shape_cast %4 : vector<1x4x128xf32> to vector<4x128xf32>
    %cst = arith.constant dense<0.000000e+00> : vector<4x384xf32>
    %6 = tpu.matmul %5, %0, %cst {dimension_numbers = #tpu.dot_dimension_numbers<[1], [0], [0], [1], [0, 0, 1, 1], [], []>} : vector<4x128xf32>, vector<128x384xf32>, vector<4x384xf32> -> vector<4x384xf32>
    %7 = vector.broadcast %2 : vector<1x384xf32> to vector<4x384xf32>
    %8 = arith.addf %6, %7 : vector<4x384xf32>
    %c0_10 = arith.constant 0 : index
    %c0_11 = arith.constant 0 : index
    %c0_12 = arith.constant 0 : index
    %9 = vector.load %arg8[%c0_10, %c0_11, %c0_12] : memref<3x4x384xf32, #tpu.memory_space<vmem>>, vector<1x4x384xf32>
    %10 = vector.shape_cast %9 : vector<1x4x384xf32> to vector<4x384xf32>
    %11 = vector.shape_cast %8 : vector<4x384xf32> to vector<1x4x384xf32>
    tpu.vector_store %arg8[%c0_10, %c0_11, %c0_12], %11 {strides = array<i32>} : memref<3x4x384xf32, #tpu.memory_space<vmem>>, vector<1x4x384xf32>,
    %c1 = arith.constant 1 : index
    %c0_13 = arith.constant 0 : index
    %c0_14 = arith.constant 0 : index
    %12 = vector.load %arg1[%c1, %c0_13, %c0_14] : memref<3x4x128xf32, #tpu.memory_space<vmem>>, vector<1x4x128xf32>
    %13 = vector.shape_cast %12 : vector<1x4x128xf32> to vector<4x128xf32>
    %cst_15 = arith.constant dense<0.000000e+00> : vector<4x384xf32>
    %14 = tpu.matmul %13, %0, %cst_15 {dimension_numbers = #tpu.dot_dimension_numbers<[1], [0], [0], [1], [0, 0, 1, 1], [], []>} : vector<4x128xf32>, vector<128x384xf32>, vector<4x384xf32> -> vector<4x384xf32>
    %15 = vector.broadcast %2 : vector<1x384xf32> to vector<4x384xf32>
    %16 = arith.addf %14, %15 : vector<4x384xf32>
    %c1_16 = arith.constant 1 : index
    %c0_17 = arith.constant 0 : index
    %c0_18 = arith.constant 0 : index
    %17 = vector.load %arg8[%c1_16, %c0_17, %c0_18] : memref<3x4x384xf32, #tpu.memory_space<vmem>>, vector<1x4x384xf32>
    %18 = vector.shape_cast %17 : vector<1x4x384xf32> to vector<4x384xf32>
    %19 = vector.shape_cast %16 : vector<4x384xf32> to vector<1x4x384xf32>
    tpu.vector_store %arg8[%c1_16, %c0_17, %c0_18], %19 {strides = array<i32>} : memref<3x4x384xf32, #tpu.memory_space<vmem>>, vector<1x4x384xf32>,
    %c2 = arith.constant 2 : index
    %c0_19 = arith.constant 0 : index
    %c0_20 = arith.constant 0 : index
    %20 = vector.load %arg1[%c2, %c0_19, %c0_20] : memref<3x4x128xf32, #tpu.memory_space<vmem>>, vector<1x4x128xf32>
    %21 = vector.shape_cast %20 : vector<1x4x128xf32> to vector<4x128xf32>
    %cst_21 = arith.constant dense<0.000000e+00> : vector<4x384xf32>
    %22 = tpu.matmul %21, %0, %cst_21 {dimension_numbers = #tpu.dot_dimension_numbers<[1], [0], [0], [1], [0, 0, 1, 1], [], []>} : vector<4x128xf32>, vector<128x384xf32>, vector<4x384xf32> -> vector<4x384xf32>
    %23 = vector.broadcast %2 : vector<1x384xf32> to vector<4x384xf32>
    %24 = arith.addf %22, %23 : vector<4x384xf32>
    %c2_22 = arith.constant 2 : index
    %c0_23 = arith.constant 0 : index
    %c0_24 = arith.constant 0 : index
    %25 = vector.load %arg8[%c2_22, %c0_23, %c0_24] : memref<3x4x384xf32, #tpu.memory_space<vmem>>, vector<1x4x384xf32>
    %26 = vector.shape_cast %25 : vector<1x4x384xf32> to vector<4x384xf32>
    %27 = vector.shape_cast %24 : vector<4x384xf32> to vector<1x4x384xf32>
    tpu.vector_store %arg8[%c2_22, %c0_23, %c0_24], %27 {strides = array<i32>} : memref<3x4x384xf32, #tpu.memory_space<vmem>>, vector<1x4x384xf32>,
    %c0_25 = arith.constant 0 : index
    %c0_26 = arith.constant 0 : index
    %28 = vector.load %arg2[%c0_25, %c0_26] : memref<4x128xf32, #tpu.memory_space<vmem>>, vector<4x128xf32>
    %c0_i32 = arith.constant 0 : i32
    %29 = arith.index_cast %c0_i32 : i32 to index
    %c0_27 = arith.constant 0 : index
    %c0_28 = arith.constant 0 : index
    %30 = vector.load %arg8[%29, %c0_27, %c0_28] : memref<3x4x384xf32, #tpu.memory_space<vmem>>, vector<1x4x384xf32>
    %31 = vector.shape_cast %30 : vector<1x4x384xf32> to vector<4x384xf32>
    %cst_29 = arith.constant dense<0.000000e+00> : vector<4x384xf32>
    %32 = tpu.matmul %28, %1, %cst_29 {dimension_numbers = #tpu.dot_dimension_numbers<[1], [0], [0], [1], [0, 0, 1, 1], [], []>} : vector<4x128xf32>, vector<128x384xf32>, vector<4x384xf32> -> vector<4x384xf32>
    %33 = vector.broadcast %3 : vector<1x384xf32> to vector<4x384xf32>
    %34 = arith.addf %32, %33 : vector<4x384xf32>
    %35 = vector.extract_strided_slice %31 {offsets = [0, 0], sizes = [4, 128], strides = [1, 1]} : vector<4x384xf32> to vector<4x128xf32>
    %36 = vector.extract_strided_slice %34 {offsets = [0, 0], sizes = [4, 128], strides = [1, 1]} : vector<4x384xf32> to vector<4x128xf32>
    %37 = arith.addf %35, %36 : vector<4x128xf32>
    %38 = arith.negf %37 : vector<4x128xf32>
    %39 = math.exp %38 : vector<4x128xf32>
    %cst_30 = arith.constant 1.000000e+00 : f32
    %40 = vector.broadcast %cst_30 : f32 to vector<4x128xf32>
    %41 = arith.addf %40, %39 : vector<4x128xf32>
    %42 = arith.divf %40, %41 : vector<4x128xf32>
    %43 = vector.extract_strided_slice %31 {offsets = [0, 128], sizes = [4, 128], strides = [1, 1]} : vector<4x384xf32> to vector<4x128xf32>
    %44 = vector.extract_strided_slice %34 {offsets = [0, 128], sizes = [4, 128], strides = [1, 1]} : vector<4x384xf32> to vector<4x128xf32>
    %45 = arith.addf %43, %44 : vector<4x128xf32>
    %46 = arith.negf %45 : vector<4x128xf32>
    %47 = math.exp %46 : vector<4x128xf32>
    %cst_31 = arith.constant 1.000000e+00 : f32
    %48 = vector.broadcast %cst_31 : f32 to vector<4x128xf32>
    %49 = arith.addf %48, %47 : vector<4x128xf32>
    %50 = arith.divf %48, %49 : vector<4x128xf32>
    %51 = vector.extract_strided_slice %31 {offsets = [0, 256], sizes = [4, 128], strides = [1, 1]} : vector<4x384xf32> to vector<4x128xf32>
    %52 = vector.extract_strided_slice %34 {offsets = [0, 256], sizes = [4, 128], strides = [1, 1]} : vector<4x384xf32> to vector<4x128xf32>
    %53 = arith.mulf %42, %52 : vector<4x128xf32>
    %54 = arith.addf %51, %53 : vector<4x128xf32>
    %55 = math.tanh %54 : vector<4x128xf32>
    %56 = arith.subf %28, %55 : vector<4x128xf32>
    %57 = arith.mulf %50, %56 : vector<4x128xf32>
    %58 = arith.addf %55, %57 : vector<4x128xf32>
    %c1_i32 = arith.constant 1 : i32
    %59 = arith.index_cast %c1_i32 : i32 to index
    %c0_32 = arith.constant 0 : index
    %c0_33 = arith.constant 0 : index
    %60 = vector.load %arg8[%59, %c0_32, %c0_33] : memref<3x4x384xf32, #tpu.memory_space<vmem>>, vector<1x4x384xf32>
    %61 = vector.shape_cast %60 : vector<1x4x384xf32> to vector<4x384xf32>
    %cst_34 = arith.constant dense<0.000000e+00> : vector<4x384xf32>
    %62 = tpu.matmul %58, %1, %cst_34 {dimension_numbers = #tpu.dot_dimension_numbers<[1], [0], [0], [1], [0, 0, 1, 1], [], []>} : vector<4x128xf32>, vector<128x384xf32>, vector<4x384xf32> -> vector<4x384xf32>
    %63 = vector.broadcast %3 : vector<1x384xf32> to vector<4x384xf32>
    %64 = arith.addf %62, %63 : vector<4x384xf32>
    %65 = vector.extract_strided_slice %61 {offsets = [0, 0], sizes = [4, 128], strides = [1, 1]} : vector<4x384xf32> to vector<4x128xf32>
    %66 = vector.extract_strided_slice %64 {offsets = [0, 0], sizes = [4, 128], strides = [1, 1]} : vector<4x384xf32> to vector<4x128xf32>
    %67 = arith.addf %65, %66 : vector<4x128xf32>
    %68 = arith.negf %67 : vector<4x128xf32>
    %69 = math.exp %68 : vector<4x128xf32>
    %cst_35 = arith.constant 1.000000e+00 : f32
    %70 = vector.broadcast %cst_35 : f32 to vector<4x128xf32>
    %71 = arith.addf %70, %69 : vector<4x128xf32>
    %72 = arith.divf %70, %71 : vector<4x128xf32>
    %73 = vector.extract_strided_slice %61 {offsets = [0, 128], sizes = [4, 128], strides = [1, 1]} : vector<4x384xf32> to vector<4x128xf32>
    %74 = vector.extract_strided_slice %64 {offsets = [0, 128], sizes = [4, 128], strides = [1, 1]} : vector<4x384xf32> to vector<4x128xf32>
    %75 = arith.addf %73, %74 : vector<4x128xf32>
    %76 = arith.negf %75 : vector<4x128xf32>
    %77 = math.exp %76 : vector<4x128xf32>
    %cst_36 = arith.constant 1.000000e+00 : f32
    %78 = vector.broadcast %cst_36 : f32 to vector<4x128xf32>
    %79 = arith.addf %78, %77 : vector<4x128xf32>
    %80 = arith.divf %78, %79 : vector<4x128xf32>
    %81 = vector.extract_strided_slice %61 {offsets = [0, 256], sizes = [4, 128], strides = [1, 1]} : vector<4x384xf32> to vector<4x128xf32>
    %82 = vector.extract_strided_slice %64 {offsets = [0, 256], sizes = [4, 128], strides = [1, 1]} : vector<4x384xf32> to vector<4x128xf32>
    %83 = arith.mulf %72, %82 : vector<4x128xf32>
    %84 = arith.addf %81, %83 : vector<4x128xf32>
    %85 = math.tanh %84 : vector<4x128xf32>
    %86 = arith.subf %58, %85 : vector<4x128xf32>
    %87 = arith.mulf %80, %86 : vector<4x128xf32>
    %88 = arith.addf %85, %87 : vector<4x128xf32>
    %c2_i32 = arith.constant 2 : i32
    %89 = arith.index_cast %c2_i32 : i32 to index
    %c0_37 = arith.constant 0 : index
    %c0_38 = arith.constant 0 : index
    %90 = vector.load %arg8[%89, %c0_37, %c0_38] : memref<3x4x384xf32, #tpu.memory_space<vmem>>, vector<1x4x384xf32>
    %91 = vector.shape_cast %90 : vector<1x4x384xf32> to vector<4x384xf32>
    %cst_39 = arith.constant dense<0.000000e+00> : vector<4x384xf32>
    %92 = tpu.matmul %88, %1, %cst_39 {dimension_numbers = #tpu.dot_dimension_numbers<[1], [0], [0], [1], [0, 0, 1, 1], [], []>} : vector<4x128xf32>, vector<128x384xf32>, vector<4x384xf32> -> vector<4x384xf32>
    %93 = vector.broadcast %3 : vector<1x384xf32> to vector<4x384xf32>
    %94 = arith.addf %92, %93 : vector<4x384xf32>
    %95 = vector.extract_strided_slice %91 {offsets = [0, 0], sizes = [4, 128], strides = [1, 1]} : vector<4x384xf32> to vector<4x128xf32>
    %96 = vector.extract_strided_slice %94 {offsets = [0, 0], sizes = [4, 128], strides = [1, 1]} : vector<4x384xf32> to vector<4x128xf32>
    %97 = arith.addf %95, %96 : vector<4x128xf32>
    %98 = arith.negf %97 : vector<4x128xf32>
    %99 = math.exp %98 : vector<4x128xf32>
    %cst_40 = arith.constant 1.000000e+00 : f32
    %100 = vector.broadcast %cst_40 : f32 to vector<4x128xf32>
    %101 = arith.addf %100, %99 : vector<4x128xf32>
    %102 = arith.divf %100, %101 : vector<4x128xf32>
    %103 = vector.extract_strided_slice %91 {offsets = [0, 128], sizes = [4, 128], strides = [1, 1]} : vector<4x384xf32> to vector<4x128xf32>
    %104 = vector.extract_strided_slice %94 {offsets = [0, 128], sizes = [4, 128], strides = [1, 1]} : vector<4x384xf32> to vector<4x128xf32>
    %105 = arith.addf %103, %104 : vector<4x128xf32>
    %106 = arith.negf %105 : vector<4x128xf32>
    %107 = math.exp %106 : vector<4x128xf32>
    %cst_41 = arith.constant 1.000000e+00 : f32
    %108 = vector.broadcast %cst_41 : f32 to vector<4x128xf32>
    %109 = arith.addf %108, %107 : vector<4x128xf32>
    %110 = arith.divf %108, %109 : vector<4x128xf32>
    %111 = vector.extract_strided_slice %91 {offsets = [0, 256], sizes = [4, 128], strides = [1, 1]} : vector<4x384xf32> to vector<4x128xf32>
    %112 = vector.extract_strided_slice %94 {offsets = [0, 256], sizes = [4, 128], strides = [1, 1]} : vector<4x384xf32> to vector<4x128xf32>
    %113 = arith.mulf %102, %112 : vector<4x128xf32>
    %114 = arith.addf %111, %113 : vector<4x128xf32>
    %115 = math.tanh %114 : vector<4x128xf32>
    %116 = arith.subf %88, %115 : vector<4x128xf32>
    %117 = arith.mulf %110, %116 : vector<4x128xf32>
    %118 = arith.addf %115, %117 : vector<4x128xf32>
    %c3_i32 = arith.constant 3 : i32
    %c0_42 = arith.constant 0 : index
    %c0_43 = arith.constant 0 : index
    %119 = vector.load %arg7[%c0_42, %c0_43] : memref<4x128xf32, #tpu.memory_space<vmem>>, vector<4x128xf32>
    tpu.vector_store %arg7[%c0_42, %c0_43], %118 {strides = array<i32>} : memref<4x128xf32, #tpu.memory_space<vmem>>, vector<4x128xf32>,
    return
  }
  func.func @transform_0(%arg0: i32) -> (i32, i32, i32) {
    %c0_i32 = arith.constant 0 : i32
    %c0_i32_0 = arith.constant 0 : i32
    %c0_i32_1 = arith.constant 0 : i32
    %c0_i32_2 = arith.constant 0 : i32
    return %c0_i32, %c0_i32_0, %c0_i32_1 : i32, i32, i32
  }
  func.func @transform_1(%arg0: i32) -> (i32, i32) {
    %c0_i32 = arith.constant 0 : i32
    %c0_i32_0 = arith.constant 0 : i32
    %c0_i32_1 = arith.constant 0 : i32
    return %c0_i32, %c0_i32_0 : i32, i32
  }
  func.func @transform_2(%arg0: i32) -> (i32, i32) {
    %c0_i32 = arith.constant 0 : i32
    %c0_i32_0 = arith.constant 0 : i32
    %c0_i32_1 = arith.constant 0 : i32
    return %c0_i32, %c0_i32_0 : i32, i32
  }
  func.func @transform_3(%arg0: i32) -> (i32, i32) {
    %c0_i32 = arith.constant 0 : i32
    %c0_i32_0 = arith.constant 0 : i32
    %c0_i32_1 = arith.constant 0 : i32
    return %c0_i32, %c0_i32_0 : i32, i32
  }
  func.func @transform_4(%arg0: i32) -> (i32, i32) {
    %c0_i32 = arith.constant 0 : i32
    %c0_i32_0 = arith.constant 0 : i32
    %c0_i32_1 = arith.constant 0 : i32
    return %c0_i32, %c0_i32_0 : i32, i32
  }
  func.func @transform_5(%arg0: i32) -> (i32, i32) {
    %c0_i32 = arith.constant 0 : i32
    %c0_i32_0 = arith.constant 0 : i32
    %c0_i32_1 = arith.constant 0 : i32
    return %c0_i32, %c0_i32_0 : i32, i32
  }
  func.func @transform_6(%arg0: i32) -> (i32, i32) {
    %c0_i32 = arith.constant 0 : i32
    %c0_i32_0 = arith.constant 0 : i32
    %c0_i32_1 = arith.constant 0 : i32
    return %c0_i32, %c0_i32_0 : i32, i32
  }
}

module attributes {stable_mosaic.version = 11 : i64} {
  func.func @_output_proj_kernel(%arg0: i32, %arg1: memref<4x128xf32, #tpu.memory_space<vmem>>, %arg2: memref<4x128xf32, #tpu.memory_space<vmem>>, %arg3: memref<128x128xf32, #tpu.memory_space<vmem>>, %arg4: memref<128x128xf32, #tpu.memory_space<vmem>>, %arg5: memref<1x128xf32, #tpu.memory_space<vmem>>, %arg6: memref<4x128xf32, #tpu.memory_space<vmem>>) attributes {dimension_semantics = [#tpu.dimension_semantics<parallel>], iteration_bounds = array<i64: 1>, scalar_prefetch = 0 : i64, scratch_operands = 0 : i64, tpu.core_type = #tpu.core_type<tc>, window_params = [{pipeline_mode = #tpu.pipeline_mode<synchronous>, transform_indices = @transform_0, window_bounds = array<i64: 4, 128>}, {pipeline_mode = #tpu.pipeline_mode<synchronous>, transform_indices = @transform_1, window_bounds = array<i64: 4, 128>}, {transform_indices = @transform_2, window_bounds = array<i64: 128, 128>}, {transform_indices = @transform_3, window_bounds = array<i64: 128, 128>}, {transform_indices = @transform_4, window_bounds = array<i64: 1, 128>}, {transform_indices = @transform_5, window_bounds = array<i64: 4, 128>}]} {
    %c0 = arith.constant 0 : index
    %c0_0 = arith.constant 0 : index
    %0 = vector.load %arg1[%c0, %c0_0] : memref<4x128xf32, #tpu.memory_space<vmem>>, vector<4x128xf32>
    %c0_1 = arith.constant 0 : index
    %c0_2 = arith.constant 0 : index
    %1 = vector.load %arg3[%c0_1, %c0_2] : memref<128x128xf32, #tpu.memory_space<vmem>>, vector<128x128xf32>
    %cst = arith.constant dense<0.000000e+00> : vector<4x128xf32>
    %2 = tpu.matmul %0, %1, %cst {dimension_numbers = #tpu.dot_dimension_numbers<[1], [0], [0], [1], [0, 0, 1, 1], [], []>} : vector<4x128xf32>, vector<128x128xf32>, vector<4x128xf32> -> vector<4x128xf32>
    %c0_3 = arith.constant 0 : index
    %c0_4 = arith.constant 0 : index
    %3 = vector.load %arg2[%c0_3, %c0_4] : memref<4x128xf32, #tpu.memory_space<vmem>>, vector<4x128xf32>
    %c0_5 = arith.constant 0 : index
    %c0_6 = arith.constant 0 : index
    %4 = vector.load %arg4[%c0_5, %c0_6] : memref<128x128xf32, #tpu.memory_space<vmem>>, vector<128x128xf32>
    %cst_7 = arith.constant dense<0.000000e+00> : vector<4x128xf32>
    %5 = tpu.matmul %3, %4, %cst_7 {dimension_numbers = #tpu.dot_dimension_numbers<[1], [0], [0], [1], [0, 0, 1, 1], [], []>} : vector<4x128xf32>, vector<128x128xf32>, vector<4x128xf32> -> vector<4x128xf32>
    %6 = arith.addf %2, %5 : vector<4x128xf32>
    %c0_8 = arith.constant 0 : index
    %c0_9 = arith.constant 0 : index
    %7 = vector.load %arg5[%c0_8, %c0_9] : memref<1x128xf32, #tpu.memory_space<vmem>>, vector<1x128xf32>
    %8 = vector.broadcast %7 : vector<1x128xf32> to vector<4x128xf32>
    %9 = arith.addf %6, %8 : vector<4x128xf32>
    %c0_10 = arith.constant 0 : index
    %c0_11 = arith.constant 0 : index
    %10 = vector.load %arg6[%c0_10, %c0_11] : memref<4x128xf32, #tpu.memory_space<vmem>>, vector<4x128xf32>
    tpu.vector_store %arg6[%c0_10, %c0_11], %9 {strides = array<i32>} : memref<4x128xf32, #tpu.memory_space<vmem>>, vector<4x128xf32>,
    return
  }
  func.func @transform_0(%arg0: i32) -> (i32, i32) {
    %c0_i32 = arith.constant 0 : i32
    %c0_i32_0 = arith.constant 0 : i32
    %c0_i32_1 = arith.constant 0 : i32
    return %c0_i32, %c0_i32_0 : i32, i32
  }
  func.func @transform_1(%arg0: i32) -> (i32, i32) {
    %c0_i32 = arith.constant 0 : i32
    %c0_i32_0 = arith.constant 0 : i32
    %c0_i32_1 = arith.constant 0 : i32
    return %c0_i32, %c0_i32_0 : i32, i32
  }
  func.func @transform_2(%arg0: i32) -> (i32, i32) {
    %c0_i32 = arith.constant 0 : i32
    %c0_i32_0 = arith.constant 0 : i32
    return %c0_i32, %arg0 : i32, i32
  }
  func.func @transform_3(%arg0: i32) -> (i32, i32) {
    %c0_i32 = arith.constant 0 : i32
    %c0_i32_0 = arith.constant 0 : i32
    return %c0_i32, %arg0 : i32, i32
  }
  func.func @transform_4(%arg0: i32) -> (i32, i32) {
    %c0_i32 = arith.constant 0 : i32
    %c0_i32_0 = arith.constant 0 : i32
    return %c0_i32, %arg0 : i32, i32
  }
  func.func @transform_5(%arg0: i32) -> (i32, i32) {
    %c0_i32 = arith.constant 0 : i32
    %c0_i32_0 = arith.constant 0 : i32
    return %c0_i32, %arg0 : i32, i32
  }
}

</mosaic_0001>

<llo_original>
// kernel: decoder_forward.3
$region0: #{decoder_forward.3}
  #allocation0 [shape = 'u32[]', space=smem, size = 0x4, offset = 0x4, fixed_abs, tag = 'smem constant byte address 0x4 - core index']
  #allocation1 [shape = 'u32[144,128]{1,0:T(1,128)}', space=vmem, size = 0x12000, scoped, tag = 'internal scratch']
  %s0 = inlined_call_operand.vmem [shape: f32[4,128], index: 0, kind: input, shape index: {}]
  %s1 = inlined_call_operand.vmem [shape: f32[4,128], index: 1, kind: input, shape index: {}]
  %s2 = inlined_call_operand.vmem [shape: f32[128,128], index: 2, kind: input, shape index: {}]
  %s3 = inlined_call_operand.vmem [shape: f32[128,128], index: 3, kind: input, shape index: {}]
  %s4 = inlined_call_operand.vmem [shape: f32[1,128], index: 4, kind: input, shape index: {}]
  %s5 = inlined_call_operand.vmem [shape: f32[4,128], index: 5, kind: output, shape index: {}]
  %s6 = sld [smem:[#allocation0]]
  $region30: #{decoder_forward.3} parent=0
    _
  %s8 = ssub.s32 1, %s6
  %s9 = scalar_select 0, %s8, %s6
  // Predicated region
  $region2: #{decoder_forward.3} parent=0 // pred_check
    _
  $region3: #{decoder_forward.3} parent=0 // pred_check_branch
    %11 = sbr.rel (0) target = $region5
  $region4: #{decoder_forward.3} parent=0 // pred_region
    _
  $region5: #{decoder_forward.3} parent=0 // pred_fallthru
    _
  // Predicated region
  $region6: #{decoder_forward.3} parent=0 // pred_check
    _
  $region7: #{decoder_forward.3} parent=0 // pred_check_branch
    %13 = sbr.rel (0) target = $region9
  $region8: #{decoder_forward.3} parent=0 // pred_region
    _
  $region9: #{decoder_forward.3} parent=0 // pred_fallthru
    _
  // Predicated region
  $region10: #{decoder_forward.3} parent=0 // pred_check
    _
  $region11: #{decoder_forward.3} parent=0 // pred_check_branch
    %15 = sbr.rel (0) target = $region13
  $region12: #{decoder_forward.3} parent=0 // pred_region
    _
  $region13: #{decoder_forward.3} parent=0 // pred_fallthru
    _
  // Predicated region
  $region14: #{decoder_forward.3} parent=0 // pred_check
    _
  $region15: #{decoder_forward.3} parent=0 // pred_check_branch
    %17 = sbr.rel (0) target = $region17
  $region16: #{decoder_forward.3} parent=0 // pred_region
    _
  $region17: #{decoder_forward.3} parent=0 // pred_fallthru
    _
  // Predicated region
  $region18: #{decoder_forward.3} parent=0 // pred_check
    _
  $region19: #{decoder_forward.3} parent=0 // pred_check_branch
    %19 = sbr.rel (0) target = $region21
  $region20: #{decoder_forward.3} parent=0 // pred_region
    _
  $region21: #{decoder_forward.3} parent=0 // pred_fallthru
    _
  %v20 = vld [vmem:[%s0] sm:$0xf]
  %v21 = vld [vmem:[%s2] sm:$0xff]
  %v22 = vld [vmem:[%s2 + $0x8] sm:$0xff]
  %v23 = vld [vmem:[%s2 + $0x10] sm:$0xff]
  %v24 = vld [vmem:[%s2 + $0x18] sm:$0xff]
  %v25 = vld [vmem:[%s2 + $0x20] sm:$0xff]
  %v26 = vld [vmem:[%s2 + $0x28] sm:$0xff]
  %v27 = vld [vmem:[%s2 + $0x30] sm:$0xff]
  %v28 = vld [vmem:[%s2 + $0x38] sm:$0xff]
  %v29 = vld [vmem:[%s2 + $0x40] sm:$0xff]
  %v30 = vld [vmem:[%s2 + $0x48] sm:$0xff]
  %v31 = vld [vmem:[%s2 + $0x50] sm:$0xff]
  %v32 = vld [vmem:[%s2 + $0x58] sm:$0xff]
  %v33 = vld [vmem:[%s2 + $0x60] sm:$0xff]
  %v34 = vld [vmem:[%s2 + $0x68] sm:$0xff]
  %v35 = vld [vmem:[%s2 + $0x70] sm:$0xff]
  %v36 = vld [vmem:[%s2 + $0x78] sm:$0xff]
  %v37 = vld [vmem:[%s1] sm:$0xf]
  %v38 = vld [vmem:[%s3] sm:$0xff]
  %v39 = vld [vmem:[%s3 + $0x8] sm:$0xff]
  %v40 = vld [vmem:[%s3 + $0x10] sm:$0xff]
  %v41 = vld [vmem:[%s3 + $0x18] sm:$0xff]
  %v42 = vld [vmem:[%s3 + $0x20] sm:$0xff]
  %v43 = vld [vmem:[%s3 + $0x28] sm:$0xff]
  %v44 = vld [vmem:[%s3 + $0x30] sm:$0xff]
  %v45 = vld [vmem:[%s3 + $0x38] sm:$0xff]
  %v46 = vld [vmem:[%s3 + $0x40] sm:$0xff]
  %v47 = vld [vmem:[%s3 + $0x48] sm:$0xff]
  %v48 = vld [vmem:[%s3 + $0x50] sm:$0xff]
  %v49 = vld [vmem:[%s3 + $0x58] sm:$0xff]
  %v50 = vld [vmem:[%s3 + $0x60] sm:$0xff]
  %v51 = vld [vmem:[%s3 + $0x68] sm:$0xff]
  %v52 = vld [vmem:[%s3 + $0x70] sm:$0xff]
  %v53 = vld [vmem:[%s3 + $0x78] sm:$0xff]
  %54 = vmatprep.subr.mxu0 0.0
  %55 = vmatpush1.msra.mxu0 %v38
  %56 = vmatprep.subr.mxu0 0.0
  %57 = vmatpush1.msra.mxu0 %v39
  %58 = vmatprep.subr.mxu0 0.0
  %59 = vmatpush1.msra.mxu0 %v40
  %60 = vmatprep.subr.mxu0 0.0
  %61 = vmatpush1.msra.mxu0 %v41
  %62 = vmatprep.subr.mxu0 0.0
  %63 = vmatpush1.msra.mxu0 %v42
  %64 = vmatprep.subr.mxu0 0.0
  %65 = vmatpush1.msra.mxu0 %v43
  %66 = vmatprep.subr.mxu0 0.0
  %67 = vmatpush1.msra.mxu0 %v44
  %68 = vmatprep.subr.mxu0 0.0
  %69 = vmatpush1.msra.mxu0 %v45
  %70 = vmatprep.subr.mxu0 0.0
  %71 = vmatpush1.msra.mxu0 %v46
  %72 = vmatprep.subr.mxu0 0.0
  %73 = vmatpush1.msra.mxu0 %v47
  %74 = vmatprep.subr.mxu0 0.0
  %75 = vmatpush1.msra.mxu0 %v48
  %76 = vmatprep.subr.mxu0 0.0
  %77 = vmatpush1.msra.mxu0 %v49
  %78 = vmatprep.subr.mxu0 0.0
  %79 = vmatpush1.msra.mxu0 %v50
  %80 = vmatprep.subr.mxu0 0.0
  %81 = vmatpush1.msra.mxu0 %v51
  %82 = vmatprep.subr.mxu0 0.0
  %83 = vmatpush1.msra.mxu0 %v52
  %84 = vmatprep.subr.mxu0 0.0
  %85 = vmatpush1.msra.mxu0 %v53
  %86 = vmatprep.subr.mxu0 0.0
  %87 = vmatpush1.msra.mxu0 0.0
  %88 = vmatprep.subr.mxu0 0.0
  %89 = vmatpush1.msra.mxu0 0.0
  %90 = vmatprep.subr.mxu0 0.0
  %91 = vmatpush1.msra.mxu0 0.0
  %92 = vmatprep.subr.mxu0 0.0
  %93 = vmatpush1.msra.mxu0 0.0
  %94 = vmatprep.subr.mxu0 0.0
  %95 = vmatpush1.msra.mxu0 0.0
  %96 = vmatprep.subr.mxu0 0.0
  %97 = vmatpush1.msra.mxu0 0.0
  %98 = vmatprep.subr.mxu0 0.0
  %99 = vmatpush1.msra.mxu0 0.0
  %100 = vmatprep.subr.mxu0 0.0
  %101 = vmatpush1.msra.mxu0 0.0
  %102 = vmatprep.subr.mxu0 0.0
  %103 = vmatpush1.msra.mxu0 0.0
  %104 = vmatprep.subr.mxu0 0.0
  %105 = vmatpush1.msra.mxu0 0.0
  %106 = vmatprep.subr.mxu0 0.0
  %107 = vmatpush1.msra.mxu0 0.0
  %108 = vmatprep.subr.mxu0 0.0
  %109 = vmatpush1.msra.mxu0 0.0
  %110 = vmatprep.subr.mxu0 0.0
  %111 = vmatpush1.msra.mxu0 0.0
  %112 = vmatprep.subr.mxu0 0.0
  %113 = vmatpush1.msra.mxu0 0.0
  %114 = vmatprep.subr.mxu0 0.0
  %115 = vmatpush1.msra.mxu0 0.0
  %116 = vmatprep.subr.mxu0 0.0
  %117 = vmatpush1.msra.mxu0 0.0
  %118 = vmatprep.mubr.f32.mxu0 0.0
  %119 = vmatmul.mubr.f32.gmra.mrb[0].mxu0 %v37
  %v120 = vpop.f32.mrb[0].mxu0
  %v121 = vadd.f32 0.0, %v120
  %v122 = vpop.f32.mrb[0].mxu0
  %123 = vdwg.mxu0
  %124 = vmatprep.subr.mxu0 0.0
  %125 = vmatpush1.msra.mxu0 %v21
  %126 = vmatprep.subr.mxu0 0.0
  %127 = vmatpush1.msra.mxu0 %v22
  %128 = vmatprep.subr.mxu0 0.0
  %129 = vmatpush1.msra.mxu0 %v23
  %130 = vmatprep.subr.mxu0 0.0
  %131 = vmatpush1.msra.mxu0 %v24
  %132 = vmatprep.subr.mxu0 0.0
  %133 = vmatpush1.msra.mxu0 %v25
  %134 = vmatprep.subr.mxu0 0.0
  %135 = vmatpush1.msra.mxu0 %v26
  %136 = vmatprep.subr.mxu0 0.0
  %137 = vmatpush1.msra.mxu0 %v27
  %138 = vmatprep.subr.mxu0 0.0
  %139 = vmatpush1.msra.mxu0 %v28
  %140 = vmatprep.subr.mxu0 0.0
  %141 = vmatpush1.msra.mxu0 %v29
  %142 = vmatprep.subr.mxu0 0.0
  %143 = vmatpush1.msra.mxu0 %v30
  %144 = vmatprep.subr.mxu0 0.0
  %145 = vmatpush1.msra.mxu0 %v31
  %146 = vmatprep.subr.mxu0 0.0
  %147 = vmatpush1.msra.mxu0 %v32
  %148 = vmatprep.subr.mxu0 0.0
  %149 = vmatpush1.msra.mxu0 %v33
  %150 = vmatprep.subr.mxu0 0.0
  %151 = vmatpush1.msra.mxu0 %v34
  %152 = vmatprep.subr.mxu0 0.0
  %153 = vmatpush1.msra.mxu0 %v35
  %154 = vmatprep.subr.mxu0 0.0
  %155 = vmatpush1.msra.mxu0 %v36
  %156 = vmatprep.subr.mxu0 0.0
  %157 = vmatpush1.msra.mxu0 0.0
  %158 = vmatprep.subr.mxu0 0.0
  %159 = vmatpush1.msra.mxu0 0.0
  %160 = vmatprep.subr.mxu0 0.0
  %161 = vmatpush1.msra.mxu0 0.0
  %162 = vmatprep.subr.mxu0 0.0
  %163 = vmatpush1.msra.mxu0 0.0
  %164 = vmatprep.subr.mxu0 0.0
  %165 = vmatpush1.msra.mxu0 0.0
  %166 = vmatprep.subr.mxu0 0.0
  %167 = vmatpush1.msra.mxu0 0.0
  %168 = vmatprep.subr.mxu0 0.0
  %169 = vmatpush1.msra.mxu0 0.0
  %170 = vmatprep.subr.mxu0 0.0
  %171 = vmatpush1.msra.mxu0 0.0
  %172 = vmatprep.subr.mxu0 0.0
  %173 = vmatpush1.msra.mxu0 0.0
  %174 = vmatprep.subr.mxu0 0.0
  %175 = vmatpush1.msra.mxu0 0.0
  %176 = vmatprep.subr.mxu0 0.0
  %177 = vmatpush1.msra.mxu0 0.0
  %178 = vmatprep.subr.mxu0 0.0
  %179 = vmatpush1.msra.mxu0 0.0
  %180 = vmatprep.subr.mxu0 0.0
  %181 = vmatpush1.msra.mxu0 0.0
  %182 = vmatprep.subr.mxu0 0.0
  %183 = vmatpush1.msra.mxu0 0.0
  %184 = vmatprep.subr.mxu0 0.0
  %185 = vmatpush1.msra.mxu0 0.0
  %186 = vmatprep.subr.mxu0 0.0
  %187 = vmatpush1.msra.mxu0 0.0
  %188 = vmatprep.mubr.f32.mxu0 0.0
  %189 = vmatmul.mubr.f32.gmra.mrb[0].mxu0 %v20
  %v190 = vpop.f32.mrb[0].mxu0
  %v191 = vadd.f32 %v121, %v190
  %v192 = vpop.f32.mrb[0].mxu0
  %193 = vdwg.mxu0
  %v194 = vld [vmem:[%s4] sm:$0x1]
  %v196 = vlaneseq
  %v197 = vshrl.u32 %v196, 7
  %v198 = vsub.s32 0, %v197
  %v199 = vrot.slane %v194, %v198
  %v201 = vadd.f32 %v191, %v199
  %202 = vst [vmem:[%s5] sm:$0xf] %v201
  // Predicated region
  $region22: #{decoder_forward.3} parent=0 // pred_check
    _
  $region23: #{decoder_forward.3} parent=0 // pred_check_branch
    %204 = sbr.rel (0) target = $region25
  $region24: #{decoder_forward.3} parent=0 // pred_region
    _
  $region25: #{decoder_forward.3} parent=0 // pred_fallthru
    _
  // Predicated region
  $region26: #{decoder_forward.3} parent=0 // pred_check
    _
  $region27: #{decoder_forward.3} parent=0 // pred_check_branch
    %206 = sbr.rel (0) target = $region29
  $region28: #{decoder_forward.3} parent=0 // pred_region
    _
  $region29: #{decoder_forward.3} parent=0 // pred_fallthru
    _

// kernel: decoder_forward.2
$region0: #{decoder_forward.2}
  #allocation0 [shape = 'u32[]', space=smem, size = 0x4, offset = 0x4, fixed_abs, tag = 'smem constant byte address 0x4 - core index']
  #allocation1 [shape = 'u32[144,128]{1,0:T(1,128)}', space=vmem, size = 0x12000, scoped, tag = 'internal scratch']
  #allocation2 [shape = 'f32[3,4,384]{2,1,0:T(4,128)}', space=vmem, size = 0x4800, scoped, tag = 'scratch operand']
  %s0 = inlined_call_operand.vmem [shape: f32[3,4,128], index: 0, kind: input, shape index: {}]
  %s1 = inlined_call_operand.vmem [shape: f32[4,128], index: 1, kind: input, shape index: {}]
  %s2 = inlined_call_operand.hbm [shape: f32[128,384], index: 2, kind: input, shape index: {}]
  %s3 = inlined_call_operand.hbm [shape: f32[128,384], index: 3, kind: input, shape index: {}]
  %s4 = inlined_call_operand.vmem [shape: f32[1,384], index: 4, kind: input, shape index: {}]
  %s5 = inlined_call_operand.vmem [shape: f32[1,384], index: 5, kind: input, shape index: {}]
  %s6 = inlined_call_operand.vmem [shape: f32[4,128], index: 6, kind: output, shape index: {}]
  %s7 = sld [smem:[#allocation0]]
  $region42: #{decoder_forward.2} parent=0
    _
  %s9 = ssub.s32 1, %s7
  %s10 = scalar_select 0, %s9, %s7
  $region1: #{decoder_forward.2} parent=0
    #allocation3 [shape = 'u8[196608]{0}', space=vmem, size = 0x30000, scoped, tag = 'input window, operand 2, single buffered']
    #allocation4 [shape = 's32[1]{0}', space=sflag, size = 0x4, scoped, tag = 'scoped memory for decoder_forward.2']
    #allocation5 [shape = 'u8[196608]{0}', space=vmem, size = 0x30000, scoped, tag = 'input window, operand 3, single buffered']
    #allocation6 [shape = 's32[1]{0}', space=sflag, size = 0x4, scoped, tag = 'scoped memory for decoder_forward.2']
    %11 = vsyncpa [#allocation4], 0
    %12 = vsyncpa [#allocation6], 0
    // Predicated region
    $region2: #{decoder_forward.2} parent=1 // pred_check
      _
    $region3: #{decoder_forward.2} parent=1 // pred_check_branch
      %14 = sbr.rel (0) target = $region5
    $region4: #{decoder_forward.2} parent=1 // pred_region
      _
    $region5: #{decoder_forward.2} parent=1 // pred_fallthru
      _
    // Predicated region
    $region6: #{decoder_forward.2} parent=1 // pred_check
      _
    $region7: #{decoder_forward.2} parent=1 // pred_check_branch
      %16 = sbr.rel (0) target = $region9
    $region8: #{decoder_forward.2} parent=1 // pred_region
      _
    $region9: #{decoder_forward.2} parent=1 // pred_fallthru
      _
    // Predicated region
    $region10: #{decoder_forward.2} parent=1 // pred_check
      _
    $region11: #{decoder_forward.2} parent=1 // pred_check_branch
      %18 = sbr.rel (0) target = $region13
    $region12: #{decoder_forward.2} parent=1 // pred_region
      %s20 = ssub.s32 6144, 6144
      %21 = vsyncadd [#allocation4], %s20
      %s22 = sshll.u32 [#allocation3], 4
      %s23 = int_to_ptr.vmem [resolvable:$true] %s22
      %28 = dma.hbm_to_vmem [thread:$0]  %s2, 6144, %s23, [#allocation4], 384, 384, 24
    $region13: #{decoder_forward.2} parent=1 // pred_fallthru
      _
    // Predicated region
    $region14: #{decoder_forward.2} parent=1 // pred_check
      _
    $region15: #{decoder_forward.2} parent=1 // pred_check_branch
      %30 = sbr.rel (0) target = $region17
    $region16: #{decoder_forward.2} parent=1 // pred_region
      %s32 = ssub.s32 6144, 6144
      %33 = vsyncadd [#allocation6], %s32
      %s34 = sshll.u32 [#allocation5], 4
      %s35 = int_to_ptr.vmem [resolvable:$true] %s34
      %40 = dma.hbm_to_vmem [thread:$0]  %s3, 6144, %s35, [#allocation6], 384, 384, 24
    $region17: #{decoder_forward.2} parent=1 // pred_fallthru
      _
    // Predicated region
    $region18: #{decoder_forward.2} parent=1 // pred_check
      _
    $region19: #{decoder_forward.2} parent=1 // pred_check_branch
      %42 = sbr.rel (0) target = $region21
    $region20: #{decoder_forward.2} parent=1 // pred_region
      _
    $region21: #{decoder_forward.2} parent=1 // pred_fallthru
      _
    // Predicated region
    $region22: #{decoder_forward.2} parent=1 // pred_check
      _
    $region23: #{decoder_forward.2} parent=1 // pred_check_branch
      %44 = sbr.rel (0) target = $region25
    $region24: #{decoder_forward.2} parent=1 // pred_region
      _
    $region25: #{decoder_forward.2} parent=1 // pred_fallthru
      _
    // Predicated region
    $region26: #{decoder_forward.2} parent=1 // pred_check
      _
    $region27: #{decoder_forward.2} parent=1 // pred_check_branch
      %46 = sbr.rel (0) target = $region29
    $region28: #{decoder_forward.2} parent=1 // pred_region
      %47 = dma.done [#allocation4], 6144
    $region29: #{decoder_forward.2} parent=1 // pred_fallthru
      _
    // Predicated region
    $region30: #{decoder_forward.2} parent=1 // pred_check
      _
    $region31: #{decoder_forward.2} parent=1 // pred_check_branch
      %49 = sbr.rel (0) target = $region33
    $region32: #{decoder_forward.2} parent=1 // pred_region
      %50 = dma.done [#allocation6], 6144
    $region33: #{decoder_forward.2} parent=1 // pred_fallthru
      _
    %v51 = vld [vmem:[#allocation3] sm:$0xff]
    %v52 = vld [vmem:[#allocation3 + $0x8] sm:$0xff]
    %v53 = vld [vmem:[#allocation3 + $0x10] sm:$0xff]
    %v54 = vld [vmem:[#allocation3 + $0x18] sm:$0xff]
    %v55 = vld [vmem:[#allocation3 + $0x20] sm:$0xff]
    %v56 = vld [vmem:[#allocation3 + $0x28] sm:$0xff]
    %v57 = vld [vmem:[#allocation3 + $0x30] sm:$0xff]
    %v58 = vld [vmem:[#allocation3 + $0x38] sm:$0xff]
    %v59 = vld [vmem:[#allocation3 + $0x40] sm:$0xff]
    %v60 = vld [vmem:[#allocation3 + $0x48] sm:$0xff]
    %v61 = vld [vmem:[#allocation3 + $0x50] sm:$0xff]
    %v62 = vld [vmem:[#allocation3 + $0x58] sm:$0xff]
    %v63 = vld [vmem:[#allocation3 + $0x60] sm:$0xff]
    %v64 = vld [vmem:[#allocation3 + $0x68] sm:$0xff]
    %v65 = vld [vmem:[#allocation3 + $0x70] sm:$0xff]
    %v66 = vld [vmem:[#allocation3 + $0x78] sm:$0xff]
    %v67 = vld [vmem:[#allocation3 + $0x80] sm:$0xff]
    %v68 = vld [vmem:[#allocation3 + $0x88] sm:$0xff]
    %v69 = vld [vmem:[#allocation3 + $0x90] sm:$0xff]
    %v70 = vld [vmem:[#allocation3 + $0x98] sm:$0xff]
    %v71 = vld [vmem:[#allocation3 + $0xa0] sm:$0xff]
    %v72 = vld [vmem:[#allocation3 + $0xa8] sm:$0xff]
    %v73 = vld [vmem:[#allocation3 + $0xb0] sm:$0xff]
    %v74 = vld [vmem:[#allocation3 + $0xb8] sm:$0xff]
    %v75 = vld [vmem:[#allocation3 + $0xc0] sm:$0xff]
    %v76 = vld [vmem:[#allocation3 + $0xc8] sm:$0xff]
    %v77 = vld [vmem:[#allocation3 + $0xd0] sm:$0xff]
    %v78 = vld [vmem:[#allocation3 + $0xd8] sm:$0xff]
    %v79 = vld [vmem:[#allocation3 + $0xe0] sm:$0xff]
    %v80 = vld [vmem:[#allocation3 + $0xe8] sm:$0xff]
    %v81 = vld [vmem:[#allocation3 + $0xf0] sm:$0xff]
    %v82 = vld [vmem:[#allocation3 + $0xf8] sm:$0xff]
    %v83 = vld [vmem:[#allocation3 + $0x100] sm:$0xff]
    %v84 = vld [vmem:[#allocation3 + $0x108] sm:$0xff]
    %v85 = vld [vmem:[#allocation3 + $0x110] sm:$0xff]
    %v86 = vld [vmem:[#allocation3 + $0x118] sm:$0xff]
    %v87 = vld [vmem:[#allocation3 + $0x120] sm:$0xff]
    %v88 = vld [vmem:[#allocation3 + $0x128] sm:$0xff]
    %v89 = vld [vmem:[#allocation3 + $0x130] sm:$0xff]
    %v90 = vld [vmem:[#allocation3 + $0x138] sm:$0xff]
    %v91 = vld [vmem:[#allocation3 + $0x140] sm:$0xff]
    %v92 = vld [vmem:[#allocation3 + $0x148] sm:$0xff]
    %v93 = vld [vmem:[#allocation3 + $0x150] sm:$0xff]
    %v94 = vld [vmem:[#allocation3 + $0x158] sm:$0xff]
    %v95 = vld [vmem:[#allocation3 + $0x160] sm:$0xff]
    %v96 = vld [vmem:[#allocation3 + $0x168] sm:$0xff]
    %v97 = vld [vmem:[#allocation3 + $0x170] sm:$0xff]
    %v98 = vld [vmem:[#allocation3 + $0x178] sm:$0xff]
    %v99 = vld [vmem:[#allocation5] sm:$0xff]
    %v100 = vld [vmem:[#allocation5 + $0x8] sm:$0xff]
    %v101 = vld [vmem:[#allocation5 + $0x10] sm:$0xff]
    %v102 = vld [vmem:[#allocation5 + $0x18] sm:$0xff]
    %v103 = vld [vmem:[#allocation5 + $0x20] sm:$0xff]
    %v104 = vld [vmem:[#allocation5 + $0x28] sm:$0xff]
    %v105 = vld [vmem:[#allocation5 + $0x30] sm:$0xff]
    %v106 = vld [vmem:[#allocation5 + $0x38] sm:$0xff]
    %v107 = vld [vmem:[#allocation5 + $0x40] sm:$0xff]
    %v108 = vld [vmem:[#allocation5 + $0x48] sm:$0xff]
    %v109 = vld [vmem:[#allocation5 + $0x50] sm:$0xff]
    %v110 = vld [vmem:[#allocation5 + $0x58] sm:$0xff]
    %v111 = vld [vmem:[#allocation5 + $0x60] sm:$0xff]
    %v112 = vld [vmem:[#allocation5 + $0x68] sm:$0xff]
    %v113 = vld [vmem:[#allocation5 + $0x70] sm:$0xff]
    %v114 = vld [vmem:[#allocation5 + $0x78] sm:$0xff]
    %v115 = vld [vmem:[#allocation5 + $0x80] sm:$0xff]
    %v116 = vld [vmem:[#allocation5 + $0x88] sm:$0xff]
    %v117 = vld [vmem:[#allocation5 + $0x90] sm:$0xff]
    %v118 = vld [vmem:[#allocation5 + $0x98] sm:$0xff]
    %v119 = vld [vmem:[#allocation5 + $0xa0] sm:$0xff]
    %v120 = vld [vmem:[#allocation5 + $0xa8] sm:$0xff]
    %v121 = vld [vmem:[#allocation5 + $0xb0] sm:$0xff]
    %v122 = vld [vmem:[#allocation5 + $0xb8] sm:$0xff]
    %v123 = vld [vmem:[#allocation5 + $0xc0] sm:$0xff]
    %v124 = vld [vmem:[#allocation5 + $0xc8] sm:$0xff]
    %v125 = vld [vmem:[#allocation5 + $0xd0] sm:$0xff]
    %v126 = vld [vmem:[#allocation5 + $0xd8] sm:$0xff]
    %v127 = vld [vmem:[#allocation5 + $0xe0] sm:$0xff]
    %v128 = vld [vmem:[#allocation5 + $0xe8] sm:$0xff]
    %v129 = vld [vmem:[#allocation5 + $0xf0] sm:$0xff]
    %v130 = vld [vmem:[#allocation5 + $0xf8] sm:$0xff]
    %v131 = vld [vmem:[#allocation5 + $0x100] sm:$0xff]
    %v132 = vld [vmem:[#allocation5 + $0x108] sm:$0xff]
    %v133 = vld [vmem:[#allocation5 + $0x110] sm:$0xff]
    %v134 = vld [vmem:[#allocation5 + $0x118] sm:$0xff]
    %v135 = vld [vmem:[#allocation5 + $0x120] sm:$0xff]
    %v136 = vld [vmem:[#allocation5 + $0x128] sm:$0xff]
    %v137 = vld [vmem:[#allocation5 + $0x130] sm:$0xff]
    %v138 = vld [vmem:[#allocation5 + $0x138] sm:$0xff]
    %v139 = vld [vmem:[#allocation5 + $0x140] sm:$0xff]
    %v140 = vld [vmem:[#allocation5 + $0x148] sm:$0xff]
    %v141 = vld [vmem:[#allocation5 + $0x150] sm:$0xff]
    %v142 = vld [vmem:[#allocation5 + $0x158] sm:$0xff]
    %v143 = vld [vmem:[#allocation5 + $0x160] sm:$0xff]
    %v144 = vld [vmem:[#allocation5 + $0x168] sm:$0xff]
    %v145 = vld [vmem:[#allocation5 + $0x170] sm:$0xff]
    %v146 = vld [vmem:[#allocation5 + $0x178] sm:$0xff]
    %v147 = vld [vmem:[%s4] sm:$0x7]
    %v148 = vld [vmem:[%s5] sm:$0x7]
    %v149 = vld [vmem:[%s0] sm:$0xf]
    %v151 = vlaneseq
    %v152 = vshrl.u32 %v151, 7
    %v153 = vsub.s32 0, %v152
    %v154 = vrot.slane %v147, %v153
    %v155 = vlaneseq
    %v156 = vshrl.u32 %v155, 7
    %v157 = vsub.s32 1, %v156
    %v158 = vrot.slane %v147, %v157
    %v159 = vlaneseq
    %v160 = vshrl.u32 %v159, 7
    %v161 = vsub.s32 2, %v160
    %v162 = vrot.slane %v147, %v161
    %166 = vmatprep.subr.mxu0 %v52
    %167 = vmatpush1.msra.mxu0 %v51
    %168 = vmatprep.subr.mxu0 %v55
    %169 = vmatpush1.msra.mxu0 %v54
    %170 = vmatprep.subr.mxu0 %v58
    %171 = vmatpush1.msra.mxu0 %v57
    %172 = vmatprep.subr.mxu0 %v61
    %173 = vmatpush1.msra.mxu0 %v60
    %174 = vmatprep.subr.mxu0 %v64
    %175 = vmatpush1.msra.mxu0 %v63
    %176 = vmatprep.subr.mxu0 %v67
    %177 = vmatpush1.msra.mxu0 %v66
    %178 = vmatprep.subr.mxu0 %v70
    %179 = vmatpush1.msra.mxu0 %v69
    %180 = vmatprep.subr.mxu0 %v73
    %181 = vmatpush1.msra.mxu0 %v72
    %182 = vmatprep.subr.mxu0 %v76
    %183 = vmatpush1.msra.mxu0 %v75
    %184 = vmatprep.subr.mxu0 %v79
    %185 = vmatpush1.msra.mxu0 %v78
    %186 = vmatprep.subr.mxu0 %v82
    %187 = vmatpush1.msra.mxu0 %v81
    %188 = vmatprep.subr.mxu0 %v85
    %189 = vmatpush1.msra.mxu0 %v84
    %190 = vmatprep.subr.mxu0 %v88
    %191 = vmatpush1.msra.mxu0 %v87
    %192 = vmatprep.subr.mxu0 %v91
    %193 = vmatpush1.msra.mxu0 %v90
    %194 = vmatprep.subr.mxu0 %v94
    %195 = vmatpush1.msra.mxu0 %v93
    %196 = vmatprep.subr.mxu0 %v97
    %197 = vmatpush1.msra.mxu0 %v96
    %198 = vmatprep.subr.mxu0 0.0
    %199 = vmatpush1.msra.mxu0 0.0
    %200 = vmatprep.subr.mxu0 0.0
    %201 = vmatpush1.msra.mxu0 0.0
    %202 = vmatprep.subr.mxu0 0.0
    %203 = vmatpush1.msra.mxu0 0.0
    %204 = vmatprep.subr.mxu0 0.0
    %205 = vmatpush1.msra.mxu0 0.0
    %206 = vmatprep.subr.mxu0 0.0
    %207 = vmatpush1.msra.mxu0 0.0
    %208 = vmatprep.subr.mxu0 0.0
    %209 = vmatpush1.msra.mxu0 0.0
    %210 = vmatprep.subr.mxu0 0.0
    %211 = vmatpush1.msra.mxu0 0.0
    %212 = vmatprep.subr.mxu0 0.0
    %213 = vmatpush1.msra.mxu0 0.0
    %214 = vmatprep.subr.mxu0 0.0
    %215 = vmatpush1.msra.mxu0 0.0
    %216 = vmatprep.subr.mxu0 0.0
    %217 = vmatpush1.msra.mxu0 0.0
    %218 = vmatprep.subr.mxu0 0.0
    %219 = vmatpush1.msra.mxu0 0.0
    %220 = vmatprep.subr.mxu0 0.0
    %221 = vmatpush1.msra.mxu0 0.0
    %222 = vmatprep.subr.mxu0 0.0
    %223 = vmatpush1.msra.mxu0 0.0
    %224 = vmatprep.subr.mxu0 0.0
    %225 = vmatpush1.msra.mxu0 0.0
    %226 = vmatprep.subr.mxu0 0.0
    %227 = vmatpush1.msra.mxu0 0.0
    %228 = vmatprep.subr.mxu0 0.0
    %229 = vmatpush1.msra.mxu0 0.0
    %230 = vmatprep.mubr.f32.mxu0 0.0
    %231 = vmatmul.mubr.f32.gmra.mrb[0].mxu0 %v149
    %v232 = vpop.f32.mrb[0].mxu0
    %v233 = vadd.f32 %v154, %v232
    %v234 = vpop.f32.mrb[0].mxu0
    %v235 = vadd.f32 %v158, %v234
    %236 = vdwg.mxu0
    %237 = vmatprep.subr.mxu0 0.0
    %238 = vmatpush1.msra.mxu0 %v53
    %239 = vmatprep.subr.mxu0 0.0
    %240 = vmatpush1.msra.mxu0 %v56
    %241 = vmatprep.subr.mxu0 0.0
    %242 = vmatpush1.msra.mxu0 %v59
    %243 = vmatprep.subr.mxu0 0.0
    %244 = vmatpush1.msra.mxu0 %v62
    %245 = vmatprep.subr.mxu0 0.0
    %246 = vmatpush1.msra.mxu0 %v65
    %247 = vmatprep.subr.mxu0 0.0
    %248 = vmatpush1.msra.mxu0 %v68
    %249 = vmatprep.subr.mxu0 0.0
    %250 = vmatpush1.msra.mxu0 %v71
    %251 = vmatprep.subr.mxu0 0.0
    %252 = vmatpush1.msra.mxu0 %v74
    %253 = vmatprep.subr.mxu0 0.0
    %254 = vmatpush1.msra.mxu0 %v77
    %255 = vmatprep.subr.mxu0 0.0
    %256 = vmatpush1.msra.mxu0 %v80
    %257 = vmatprep.subr.mxu0 0.0
    %258 = vmatpush1.msra.mxu0 %v83
    %259 = vmatprep.subr.mxu0 0.0
    %260 = vmatpush1.msra.mxu0 %v86
    %261 = vmatprep.subr.mxu0 0.0
    %262 = vmatpush1.msra.mxu0 %v89
    %263 = vmatprep.subr.mxu0 0.0
    %264 = vmatpush1.msra.mxu0 %v92
    %265 = vmatprep.subr.mxu0 0.0
    %266 = vmatpush1.msra.mxu0 %v95
    %267 = vmatprep.subr.mxu0 0.0
    %268 = vmatpush1.msra.mxu0 %v98
    %269 = vmatprep.subr.mxu0 0.0
    %270 = vmatpush1.msra.mxu0 0.0
    %271 = vmatprep.subr.mxu0 0.0
    %272 = vmatpush1.msra.mxu0 0.0
    %273 = vmatprep.subr.mxu0 0.0
    %274 = vmatpush1.msra.mxu0 0.0
    %275 = vmatprep.subr.mxu0 0.0
    %276 = vmatpush1.msra.mxu0 0.0
    %277 = vmatprep.subr.mxu0 0.0
    %278 = vmatpush1.msra.mxu0 0.0
    %279 = vmatprep.subr.mxu0 0.0
    %280 = vmatpush1.msra.mxu0 0.0
    %281 = vmatprep.subr.mxu0 0.0
    %282 = vmatpush1.msra.mxu0 0.0
    %283 = vmatprep.subr.mxu0 0.0
    %284 = vmatpush1.msra.mxu0 0.0
    %285 = vmatprep.subr.mxu0 0.0
    %286 = vmatpush1.msra.mxu0 0.0
    %287 = vmatprep.subr.mxu0 0.0
    %288 = vmatpush1.msra.mxu0 0.0
    %289 = vmatprep.subr.mxu0 0.0
    %290 = vmatpush1.msra.mxu0 0.0
    %291 = vmatprep.subr.mxu0 0.0
    %292 = vmatpush1.msra.mxu0 0.0
    %293 = vmatprep.subr.mxu0 0.0
    %294 = vmatpush1.msra.mxu0 0.0
    %295 = vmatprep.subr.mxu0 0.0
    %296 = vmatpush1.msra.mxu0 0.0
    %297 = vmatprep.subr.mxu0 0.0
    %298 = vmatpush1.msra.mxu0 0.0
    %299 = vmatprep.subr.mxu0 0.0
    %300 = vmatpush1.msra.mxu0 0.0
    %301 = vmatprep.mubr.f32.mxu0 0.0
    %302 = vmatmul.mubr.f32.gmra.mrb[0].mxu0 %v149
    %v303 = vpop.f32.mrb[0].mxu0
    %v304 = vadd.f32 %v162, %v303
    %v305 = vpop.f32.mrb[0].mxu0
    %306 = vdwg.mxu0
    %v309 = vcombine.low %v233, %v235
    %311 = vst [vmem:[#allocation2] sm:$0xff] %v309
    %312 = vst [vmem:[#allocation2 + $0x8] sm:$0xf] %v304
    %s313 = scalar_lea.vmem %s0, 4
    %v314 = vld [vmem:[%s313] sm:$0xf]
    %315 = vmatprep.subr.mxu0 %v52
    %316 = vmatpush1.msra.mxu0 %v51
    %317 = vmatprep.subr.mxu0 %v55
    %318 = vmatpush1.msra.mxu0 %v54
    %319 = vmatprep.subr.mxu0 %v58
    %320 = vmatpush1.msra.mxu0 %v57
    %321 = vmatprep.subr.mxu0 %v61
    %322 = vmatpush1.msra.mxu0 %v60
    %323 = vmatprep.subr.mxu0 %v64
    %324 = vmatpush1.msra.mxu0 %v63
    %325 = vmatprep.subr.mxu0 %v67
    %326 = vmatpush1.msra.mxu0 %v66
    %327 = vmatprep.subr.mxu0 %v70
    %328 = vmatpush1.msra.mxu0 %v69
    %329 = vmatprep.subr.mxu0 %v73
    %330 = vmatpush1.msra.mxu0 %v72
    %331 = vmatprep.subr.mxu0 %v76
    %332 = vmatpush1.msra.mxu0 %v75
    %333 = vmatprep.subr.mxu0 %v79
    %334 = vmatpush1.msra.mxu0 %v78
    %335 = vmatprep.subr.mxu0 %v82
    %336 = vmatpush1.msra.mxu0 %v81
    %337 = vmatprep.subr.mxu0 %v85
    %338 = vmatpush1.msra.mxu0 %v84
    %339 = vmatprep.subr.mxu0 %v88
    %340 = vmatpush1.msra.mxu0 %v87
    %341 = vmatprep.subr.mxu0 %v91
    %342 = vmatpush1.msra.mxu0 %v90
    %343 = vmatprep.subr.mxu0 %v94
    %344 = vmatpush1.msra.mxu0 %v93
    %345 = vmatprep.subr.mxu0 %v97
    %346 = vmatpush1.msra.mxu0 %v96
    %347 = vmatprep.subr.mxu0 0.0
    %348 = vmatpush1.msra.mxu0 0.0
    %349 = vmatprep.subr.mxu0 0.0
    %350 = vmatpush1.msra.mxu0 0.0
    %351 = vmatprep.subr.mxu0 0.0
    %352 = vmatpush1.msra.mxu0 0.0
    %353 = vmatprep.subr.mxu0 0.0
    %354 = vmatpush1.msra.mxu0 0.0
    %355 = vmatprep.subr.mxu0 0.0
    %356 = vmatpush1.msra.mxu0 0.0
    %357 = vmatprep.subr.mxu0 0.0
    %358 = vmatpush1.msra.mxu0 0.0
    %359 = vmatprep.subr.mxu0 0.0
    %360 = vmatpush1.msra.mxu0 0.0
    %361 = vmatprep.subr.mxu0 0.0
    %362 = vmatpush1.msra.mxu0 0.0
    %363 = vmatprep.subr.mxu0 0.0
    %364 = vmatpush1.msra.mxu0 0.0
    %365 = vmatprep.subr.mxu0 0.0
    %366 = vmatpush1.msra.mxu0 0.0
    %367 = vmatprep.subr.mxu0 0.0
    %368 = vmatpush1.msra.mxu0 0.0
    %369 = vmatprep.subr.mxu0 0.0
    %370 = vmatpush1.msra.mxu0 0.0
    %371 = vmatprep.subr.mxu0 0.0
    %372 = vmatpush1.msra.mxu0 0.0
    %373 = vmatprep.subr.mxu0 0.0
    %374 = vmatpush1.msra.mxu0 0.0
    %375 = vmatprep.subr.mxu0 0.0
    %376 = vmatpush1.msra.mxu0 0.0
    %377 = vmatprep.subr.mxu0 0.0
    %378 = vmatpush1.msra.mxu0 0.0
    %379 = vmatprep.mubr.f32.mxu0 0.0
    %380 = vmatmul.mubr.f32.gmra.mrb[0].mxu0 %v314
    %v381 = vpop.f32.mrb[0].mxu0
    %v382 = vadd.f32 %v154, %v381
    %v383 = vpop.f32.mrb[0].mxu0
    %v384 = vadd.f32 %v158, %v383
    %385 = vdwg.mxu0
    %386 = vmatprep.subr.mxu0 0.0
    %387 = vmatpush1.msra.mxu0 %v53
    %388 = vmatprep.subr.mxu0 0.0
    %389 = vmatpush1.msra.mxu0 %v56
    %390 = vmatprep.subr.mxu0 0.0
    %391 = vmatpush1.msra.mxu0 %v59
    %392 = vmatprep.subr.mxu0 0.0
    %393 = vmatpush1.msra.mxu0 %v62
    %394 = vmatprep.subr.mxu0 0.0
    %395 = vmatpush1.msra.mxu0 %v65
    %396 = vmatprep.subr.mxu0 0.0
    %397 = vmatpush1.msra.mxu0 %v68
    %398 = vmatprep.subr.mxu0 0.0
    %399 = vmatpush1.msra.mxu0 %v71
    %400 = vmatprep.subr.mxu0 0.0
    %401 = vmatpush1.msra.mxu0 %v74
    %402 = vmatprep.subr.mxu0 0.0
    %403 = vmatpush1.msra.mxu0 %v77
    %404 = vmatprep.subr.mxu0 0.0
    %405 = vmatpush1.msra.mxu0 %v80
    %406 = vmatprep.subr.mxu0 0.0
    %407 = vmatpush1.msra.mxu0 %v83
    %408 = vmatprep.subr.mxu0 0.0
    %409 = vmatpush1.msra.mxu0 %v86
    %410 = vmatprep.subr.mxu0 0.0
    %411 = vmatpush1.msra.mxu0 %v89
    %412 = vmatprep.subr.mxu0 0.0
    %413 = vmatpush1.msra.mxu0 %v92
    %414 = vmatprep.subr.mxu0 0.0
    %415 = vmatpush1.msra.mxu0 %v95
    %416 = vmatprep.subr.mxu0 0.0
    %417 = vmatpush1.msra.mxu0 %v98
    %418 = vmatprep.subr.mxu0 0.0
    %419 = vmatpush1.msra.mxu0 0.0
    %420 = vmatprep.subr.mxu0 0.0
    %421 = vmatpush1.msra.mxu0 0.0
    %422 = vmatprep.subr.mxu0 0.0
    %423 = vmatpush1.msra.mxu0 0.0
    %424 = vmatprep.subr.mxu0 0.0
    %425 = vmatpush1.msra.mxu0 0.0
    %426 = vmatprep.subr.mxu0 0.0
    %427 = vmatpush1.msra.mxu0 0.0
    %428 = vmatprep.subr.mxu0 0.0
    %429 = vmatpush1.msra.mxu0 0.0
    %430 = vmatprep.subr.mxu0 0.0
    %431 = vmatpush1.msra.mxu0 0.0
    %432 = vmatprep.subr.mxu0 0.0
    %433 = vmatpush1.msra.mxu0 0.0
    %434 = vmatprep.subr.mxu0 0.0
    %435 = vmatpush1.msra.mxu0 0.0
    %436 = vmatprep.subr.mxu0 0.0
    %437 = vmatpush1.msra.mxu0 0.0
    %438 = vmatprep.subr.mxu0 0.0
    %439 = vmatpush1.msra.mxu0 0.0
    %440 = vmatprep.subr.mxu0 0.0
    %441 = vmatpush1.msra.mxu0 0.0
    %442 = vmatprep.subr.mxu0 0.0
    %443 = vmatpush1.msra.mxu0 0.0
    %444 = vmatprep.subr.mxu0 0.0
    %445 = vmatpush1.msra.mxu0 0.0
    %446 = vmatprep.subr.mxu0 0.0
    %447 = vmatpush1.msra.mxu0 0.0
    %448 = vmatprep.subr.mxu0 0.0
    %449 = vmatpush1.msra.mxu0 0.0
    %450 = vmatprep.mubr.f32.mxu0 0.0
    %451 = vmatmul.mubr.f32.gmra.mrb[0].mxu0 %v314
    %v452 = vpop.f32.mrb[0].mxu0
    %v453 = vadd.f32 %v162, %v452
    %v454 = vpop.f32.mrb[0].mxu0
    %455 = vdwg.mxu0
    %v458 = vcombine.low %v382, %v384
    %s460 = scalar_lea.vmem [#allocation2], 12
    %461 = vst [vmem:[%s460] sm:$0xff] %v458
    %462 = vst [vmem:[%s460 + $0x8] sm:$0xf] %v453
    %s463 = scalar_lea.vmem %s0, 8
    %v464 = vld [vmem:[%s463] sm:$0xf]
    %465 = vmatprep.subr.mxu0 %v52
    %466 = vmatpush1.msra.mxu0 %v51
    %467 = vmatprep.subr.mxu0 %v55
    %468 = vmatpush1.msra.mxu0 %v54
    %469 = vmatprep.subr.mxu0 %v58
    %470 = vmatpush1.msra.mxu0 %v57
    %471 = vmatprep.subr.mxu0 %v61
    %472 = vmatpush1.msra.mxu0 %v60
    %473 = vmatprep.subr.mxu0 %v64
    %474 = vmatpush1.msra.mxu0 %v63
    %475 = vmatprep.subr.mxu0 %v67
    %476 = vmatpush1.msra.mxu0 %v66
    %477 = vmatprep.subr.mxu0 %v70
    %478 = vmatpush1.msra.mxu0 %v69
    %479 = vmatprep.subr.mxu0 %v73
    %480 = vmatpush1.msra.mxu0 %v72
    %481 = vmatprep.subr.mxu0 %v76
    %482 = vmatpush1.msra.mxu0 %v75
    %483 = vmatprep.subr.mxu0 %v79
    %484 = vmatpush1.msra.mxu0 %v78
    %485 = vmatprep.subr.mxu0 %v82
    %486 = vmatpush1.msra.mxu0 %v81
    %487 = vmatprep.subr.mxu0 %v85
    %488 = vmatpush1.msra.mxu0 %v84
    %489 = vmatprep.subr.mxu0 %v88
    %490 = vmatpush1.msra.mxu0 %v87
    %491 = vmatprep.subr.mxu0 %v91
    %492 = vmatpush1.msra.mxu0 %v90
    %493 = vmatprep.subr.mxu0 %v94
    %494 = vmatpush1.msra.mxu0 %v93
    %495 = vmatprep.subr.mxu0 %v97
    %496 = vmatpush1.msra.mxu0 %v96
    %497 = vmatprep.subr.mxu0 0.0
    %498 = vmatpush1.msra.mxu0 0.0
    %499 = vmatprep.subr.mxu0 0.0
    %500 = vmatpush1.msra.mxu0 0.0
    %501 = vmatprep.subr.mxu0 0.0
    %502 = vmatpush1.msra.mxu0 0.0
    %503 = vmatprep.subr.mxu0 0.0
    %504 = vmatpush1.msra.mxu0 0.0
    %505 = vmatprep.subr.mxu0 0.0
    %506 = vmatpush1.msra.mxu0 0.0
    %507 = vmatprep.subr.mxu0 0.0
    %508 = vmatpush1.msra.mxu0 0.0
    %509 = vmatprep.subr.mxu0 0.0
    %510 = vmatpush1.msra.mxu0 0.0
    %511 = vmatprep.subr.mxu0 0.0
    %512 = vmatpush1.msra.mxu0 0.0
    %513 = vmatprep.subr.mxu0 0.0
    %514 = vmatpush1.msra.mxu0 0.0
    %515 = vmatprep.subr.mxu0 0.0
    %516 = vmatpush1.msra.mxu0 0.0
    %517 = vmatprep.subr.mxu0 0.0
    %518 = vmatpush1.msra.mxu0 0.0
    %519 = vmatprep.subr.mxu0 0.0
    %520 = vmatpush1.msra.mxu0 0.0
    %521 = vmatprep.subr.mxu0 0.0
    %522 = vmatpush1.msra.mxu0 0.0
    %523 = vmatprep.subr.mxu0 0.0
    %524 = vmatpush1.msra.mxu0 0.0
    %525 = vmatprep.subr.mxu0 0.0
    %526 = vmatpush1.msra.mxu0 0.0
    %527 = vmatprep.subr.mxu0 0.0
    %528 = vmatpush1.msra.mxu0 0.0
    %529 = vmatprep.mubr.f32.mxu0 0.0
    %530 = vmatmul.mubr.f32.gmra.mrb[0].mxu0 %v464
    %v531 = vpop.f32.mrb[0].mxu0
    %v532 = vadd.f32 %v154, %v531
    %v533 = vpop.f32.mrb[0].mxu0
    %v534 = vadd.f32 %v158, %v533
    %535 = vdwg.mxu0
    %536 = vmatprep.subr.mxu0 0.0
    %537 = vmatpush1.msra.mxu0 %v53
    %538 = vmatprep.subr.mxu0 0.0
    %539 = vmatpush1.msra.mxu0 %v56
    %540 = vmatprep.subr.mxu0 0.0
    %541 = vmatpush1.msra.mxu0 %v59
    %542 = vmatprep.subr.mxu0 0.0
    %543 = vmatpush1.msra.mxu0 %v62
    %544 = vmatprep.subr.mxu0 0.0
    %545 = vmatpush1.msra.mxu0 %v65
    %546 = vmatprep.subr.mxu0 0.0
    %547 = vmatpush1.msra.mxu0 %v68
    %548 = vmatprep.subr.mxu0 0.0
    %549 = vmatpush1.msra.mxu0 %v71
    %550 = vmatprep.subr.mxu0 0.0
    %551 = vmatpush1.msra.mxu0 %v74
    %552 = vmatprep.subr.mxu0 0.0
    %553 = vmatpush1.msra.mxu0 %v77
    %554 = vmatprep.subr.mxu0 0.0
    %555 = vmatpush1.msra.mxu0 %v80
    %556 = vmatprep.subr.mxu0 0.0
    %557 = vmatpush1.msra.mxu0 %v83
    %558 = vmatprep.subr.mxu0 0.0
    %559 = vmatpush1.msra.mxu0 %v86
    %560 = vmatprep.subr.mxu0 0.0
    %561 = vmatpush1.msra.mxu0 %v89
    %562 = vmatprep.subr.mxu0 0.0
    %563 = vmatpush1.msra.mxu0 %v92
    %564 = vmatprep.subr.mxu0 0.0
    %565 = vmatpush1.msra.mxu0 %v95
    %566 = vmatprep.subr.mxu0 0.0
    %567 = vmatpush1.msra.mxu0 %v98
    %568 = vmatprep.subr.mxu0 0.0
    %569 = vmatpush1.msra.mxu0 0.0
    %570 = vmatprep.subr.mxu0 0.0
    %571 = vmatpush1.msra.mxu0 0.0
    %572 = vmatprep.subr.mxu0 0.0
    %573 = vmatpush1.msra.mxu0 0.0
    %574 = vmatprep.subr.mxu0 0.0
    %575 = vmatpush1.msra.mxu0 0.0
    %576 = vmatprep.subr.mxu0 0.0
    %577 = vmatpush1.msra.mxu0 0.0
    %578 = vmatprep.subr.mxu0 0.0
    %579 = vmatpush1.msra.mxu0 0.0
    %580 = vmatprep.subr.mxu0 0.0
    %581 = vmatpush1.msra.mxu0 0.0
    %582 = vmatprep.subr.mxu0 0.0
    %583 = vmatpush1.msra.mxu0 0.0
    %584 = vmatprep.subr.mxu0 0.0
    %585 = vmatpush1.msra.mxu0 0.0
    %586 = vmatprep.subr.mxu0 0.0
    %587 = vmatpush1.msra.mxu0 0.0
    %588 = vmatprep.subr.mxu0 0.0
    %589 = vmatpush1.msra.mxu0 0.0
    %590 = vmatprep.subr.mxu0 0.0
    %591 = vmatpush1.msra.mxu0 0.0
    %592 = vmatprep.subr.mxu0 0.0
    %593 = vmatpush1.msra.mxu0 0.0
    %594 = vmatprep.subr.mxu0 0.0
    %595 = vmatpush1.msra.mxu0 0.0
    %596 = vmatprep.subr.mxu0 0.0
    %597 = vmatpush1.msra.mxu0 0.0
    %598 = vmatprep.subr.mxu0 0.0
    %599 = vmatpush1.msra.mxu0 0.0
    %600 = vmatprep.mubr.f32.mxu0 0.0
    %601 = vmatmul.mubr.f32.gmra.mrb[0].mxu0 %v464
    %v602 = vpop.f32.mrb[0].mxu0
    %v603 = vadd.f32 %v162, %v602
    %v604 = vpop.f32.mrb[0].mxu0
    %605 = vdwg.mxu0
    %v608 = vcombine.low %v532, %v534
    %s610 = scalar_lea.vmem [#allocation2], 24
    %611 = vst [vmem:[%s610] sm:$0xff] %v608
    %612 = vst [vmem:[%s610 + $0x8] sm:$0xf] %v603
    %v613 = vld [vmem:[%s1] sm:$0xf]
    %v614 = vld [vmem:[#allocation2] sm:$0xff]
    %v615 = vld [vmem:[#allocation2 + $0x8] sm:$0xf]
    %v617 = vlaneseq
    %v618 = vshrl.u32 %v617, 7
    %v619 = vsub.s32 0, %v618
    %v620 = vrot.slane %v148, %v619
    %v621 = vlaneseq
    %v622 = vshrl.u32 %v621, 7
    %v623 = vsub.s32 1, %v622
    %v624 = vrot.slane %v148, %v623
    %v625 = vlaneseq
    %v626 = vshrl.u32 %v625, 7
    %v627 = vsub.s32 2, %v626
    %v628 = vrot.slane %v148, %v627
    %632 = vmatprep.subr.mxu0 %v100
    %633 = vmatpush1.msra.mxu0 %v99
    %634 = vmatprep.subr.mxu0 %v103
    %635 = vmatpush1.msra.mxu0 %v102
    %636 = vmatprep.subr.mxu0 %v106
    %637 = vmatpush1.msra.mxu0 %v105
    %638 = vmatprep.subr.mxu0 %v109
    %639 = vmatpush1.msra.mxu0 %v108
    %640 = vmatprep.subr.mxu0 %v112
    %641 = vmatpush1.msra.mxu0 %v111
    %642 = vmatprep.subr.mxu0 %v115
    %643 = vmatpush1.msra.mxu0 %v114
    %644 = vmatprep.subr.mxu0 %v118
    %645 = vmatpush1.msra.mxu0 %v117
    %646 = vmatprep.subr.mxu0 %v121
    %647 = vmatpush1.msra.mxu0 %v120
    %648 = vmatprep.subr.mxu0 %v124
    %649 = vmatpush1.msra.mxu0 %v123
    %650 = vmatprep.subr.mxu0 %v127
    %651 = vmatpush1.msra.mxu0 %v126
    %652 = vmatprep.subr.mxu0 %v130
    %653 = vmatpush1.msra.mxu0 %v129
    %654 = vmatprep.subr.mxu0 %v133
    %655 = vmatpush1.msra.mxu0 %v132
    %656 = vmatprep.subr.mxu0 %v136
    %657 = vmatpush1.msra.mxu0 %v135
    %658 = vmatprep.subr.mxu0 %v139
    %659 = vmatpush1.msra.mxu0 %v138
    %660 = vmatprep.subr.mxu0 %v142
    %661 = vmatpush1.msra.mxu0 %v141
    %662 = vmatprep.subr.mxu0 %v145
    %663 = vmatpush1.msra.mxu0 %v144
    %664 = vmatprep.subr.mxu0 0.0
    %665 = vmatpush1.msra.mxu0 0.0
    %666 = vmatprep.subr.mxu0 0.0
    %667 = vmatpush1.msra.mxu0 0.0
    %668 = vmatprep.subr.mxu0 0.0
    %669 = vmatpush1.msra.mxu0 0.0
    %670 = vmatprep.subr.mxu0 0.0
    %671 = vmatpush1.msra.mxu0 0.0
    %672 = vmatprep.subr.mxu0 0.0
    %673 = vmatpush1.msra.mxu0 0.0
    %674 = vmatprep.subr.mxu0 0.0
    %675 = vmatpush1.msra.mxu0 0.0
    %676 = vmatprep.subr.mxu0 0.0
    %677 = vmatpush1.msra.mxu0 0.0
    %678 = vmatprep.subr.mxu0 0.0
    %679 = vmatpush1.msra.mxu0 0.0
    %680 = vmatprep.subr.mxu0 0.0
    %681 = vmatpush1.msra.mxu0 0.0
    %682 = vmatprep.subr.mxu0 0.0
    %683 = vmatpush1.msra.mxu0 0.0
    %684 = vmatprep.subr.mxu0 0.0
    %685 = vmatpush1.msra.mxu0 0.0
    %686 = vmatprep.subr.mxu0 0.0
    %687 = vmatpush1.msra.mxu0 0.0
    %688 = vmatprep.subr.mxu0 0.0
    %689 = vmatpush1.msra.mxu0 0.0
    %690 = vmatprep.subr.mxu0 0.0
    %691 = vmatpush1.msra.mxu0 0.0
    %692 = vmatprep.subr.mxu0 0.0
    %693 = vmatpush1.msra.mxu0 0.0
    %694 = vmatprep.subr.mxu0 0.0
    %695 = vmatpush1.msra.mxu0 0.0
    %696 = vmatprep.mubr.f32.mxu0 0.0
    %697 = vmatmul.mubr.f32.gmra.mrb[0].mxu0 %v613
    %v698 = vpop.f32.mrb[0].mxu0
    %v699 = vadd.f32 %v620, %v698
    %v700 = vpop.f32.mrb[0].mxu0
    %v701 = vadd.f32 %v624, %v700
    %702 = vdwg.mxu0
    %703 = vmatprep.subr.mxu0 0.0
    %704 = vmatpush1.msra.mxu0 %v101
    %705 = vmatprep.subr.mxu0 0.0
    %706 = vmatpush1.msra.mxu0 %v104
    %707 = vmatprep.subr.mxu0 0.0
    %708 = vmatpush1.msra.mxu0 %v107
    %709 = vmatprep.subr.mxu0 0.0
    %710 = vmatpush1.msra.mxu0 %v110
    %711 = vmatprep.subr.mxu0 0.0
    %712 = vmatpush1.msra.mxu0 %v113
    %713 = vmatprep.subr.mxu0 0.0
    %714 = vmatpush1.msra.mxu0 %v116
    %715 = vmatprep.subr.mxu0 0.0
    %716 = vmatpush1.msra.mxu0 %v119
    %717 = vmatprep.subr.mxu0 0.0
    %718 = vmatpush1.msra.mxu0 %v122
    %719 = vmatprep.subr.mxu0 0.0
    %720 = vmatpush1.msra.mxu0 %v125
    %721 = vmatprep.subr.mxu0 0.0
    %722 = vmatpush1.msra.mxu0 %v128
    %723 = vmatprep.subr.mxu0 0.0
    %724 = vmatpush1.msra.mxu0 %v131
    %725 = vmatprep.subr.mxu0 0.0
    %726 = vmatpush1.msra.mxu0 %v134
    %727 = vmatprep.subr.mxu0 0.0
    %728 = vmatpush1.msra.mxu0 %v137
    %729 = vmatprep.subr.mxu0 0.0
    %730 = vmatpush1.msra.mxu0 %v140
    %731 = vmatprep.subr.mxu0 0.0
    %732 = vmatpush1.msra.mxu0 %v143
    %733 = vmatprep.subr.mxu0 0.0
    %734 = vmatpush1.msra.mxu0 %v146
    %735 = vmatprep.subr.mxu0 0.0
    %736 = vmatpush1.msra.mxu0 0.0
    %737 = vmatprep.subr.mxu0 0.0
    %738 = vmatpush1.msra.mxu0 0.0
    %739 = vmatprep.subr.mxu0 0.0
    %740 = vmatpush1.msra.mxu0 0.0
    %741 = vmatprep.subr.mxu0 0.0
    %742 = vmatpush1.msra.mxu0 0.0
    %743 = vmatprep.subr.mxu0 0.0
    %744 = vmatpush1.msra.mxu0 0.0
    %745 = vmatprep.subr.mxu0 0.0
    %746 = vmatpush1.msra.mxu0 0.0
    %747 = vmatprep.subr.mxu0 0.0
    %748 = vmatpush1.msra.mxu0 0.0
    %749 = vmatprep.subr.mxu0 0.0
    %750 = vmatpush1.msra.mxu0 0.0
    %751 = vmatprep.subr.mxu0 0.0
    %752 = vmatpush1.msra.mxu0 0.0
    %753 = vmatprep.subr.mxu0 0.0
    %754 = vmatpush1.msra.mxu0 0.0
    %755 = vmatprep.subr.mxu0 0.0
    %756 = vmatpush1.msra.mxu0 0.0
    %757 = vmatprep.subr.mxu0 0.0
    %758 = vmatpush1.msra.mxu0 0.0
    %759 = vmatprep.subr.mxu0 0.0
    %760 = vmatpush1.msra.mxu0 0.0
    %761 = vmatprep.subr.mxu0 0.0
    %762 = vmatpush1.msra.mxu0 0.0
    %763 = vmatprep.subr.mxu0 0.0
    %764 = vmatpush1.msra.mxu0 0.0
    %765 = vmatprep.subr.mxu0 0.0
    %766 = vmatpush1.msra.mxu0 0.0
    %767 = vmatprep.mubr.f32.mxu0 0.0
    %768 = vmatmul.mubr.f32.gmra.mrb[0].mxu0 %v613
    %v769 = vpop.f32.mrb[0].mxu0
    %v770 = vadd.f32 %v628, %v769
    %v771 = vpop.f32.mrb[0].mxu0
    %772 = vdwg.mxu0
    %v773 = vadd.f32 %v614, %v699
    %v774 = vxor.u32 %v773, 2147483648
    %v775 = vmul.f32 %v774, 1.442695
    %v776 = vpow.pop %v775
    %v777 = vadd.f32 %v776, 1.0
    %v778 = vrcp.pop %v777
    %v779 = vmul.f32 1.0, %v778
    %v781 = vrot.slane %v614, 4
    %v783 = vadd.f32 %v781, %v701
    %v784 = vxor.u32 %v783, 2147483648
    %v785 = vmul.f32 %v784, 1.442695
    %v786 = vpow.pop %v785
    %v787 = vadd.f32 %v786, 1.0
    %v788 = vrcp.pop %v787
    %v789 = vmul.f32 1.0, %v788
    %v790 = vmul.f32 %v779, %v770
    %v791 = vadd.f32 %v615, %v790
    %v792 = vtanh.pop %v791
    %v793 = vsub.f32 %v613, %v792
    %v794 = vmul.f32 %v789, %v793
    %v795 = vadd.f32 %v792, %v794
    %v796 = vld [vmem:[%s460] sm:$0xff]
    %v797 = vld [vmem:[%s460 + $0x8] sm:$0xf]
    %798 = vmatprep.subr.mxu0 %v100
    %799 = vmatpush1.msra.mxu0 %v99
    %800 = vmatprep.subr.mxu0 %v103
    %801 = vmatpush1.msra.mxu0 %v102
    %802 = vmatprep.subr.mxu0 %v106
    %803 = vmatpush1.msra.mxu0 %v105
    %804 = vmatprep.subr.mxu0 %v109
    %805 = vmatpush1.msra.mxu0 %v108
    %806 = vmatprep.subr.mxu0 %v112
    %807 = vmatpush1.msra.mxu0 %v111
    %808 = vmatprep.subr.mxu0 %v115
    %809 = vmatpush1.msra.mxu0 %v114
    %810 = vmatprep.subr.mxu0 %v118
    %811 = vmatpush1.msra.mxu0 %v117
    %812 = vmatprep.subr.mxu0 %v121
    %813 = vmatpush1.msra.mxu0 %v120
    %814 = vmatprep.subr.mxu0 %v124
    %815 = vmatpush1.msra.mxu0 %v123
    %816 = vmatprep.subr.mxu0 %v127
    %817 = vmatpush1.msra.mxu0 %v126
    %818 = vmatprep.subr.mxu0 %v130
    %819 = vmatpush1.msra.mxu0 %v129
    %820 = vmatprep.subr.mxu0 %v133
    %821 = vmatpush1.msra.mxu0 %v132
    %822 = vmatprep.subr.mxu0 %v136
    %823 = vmatpush1.msra.mxu0 %v135
    %824 = vmatprep.subr.mxu0 %v139
    %825 = vmatpush1.msra.mxu0 %v138
    %826 = vmatprep.subr.mxu0 %v142
    %827 = vmatpush1.msra.mxu0 %v141
    %828 = vmatprep.subr.mxu0 %v145
    %829 = vmatpush1.msra.mxu0 %v144
    %830 = vmatprep.subr.mxu0 0.0
    %831 = vmatpush1.msra.mxu0 0.0
    %832 = vmatprep.subr.mxu0 0.0
    %833 = vmatpush1.msra.mxu0 0.0
    %834 = vmatprep.subr.mxu0 0.0
    %835 = vmatpush1.msra.mxu0 0.0
    %836 = vmatprep.subr.mxu0 0.0
    %837 = vmatpush1.msra.mxu0 0.0
    %838 = vmatprep.subr.mxu0 0.0
    %839 = vmatpush1.msra.mxu0 0.0
    %840 = vmatprep.subr.mxu0 0.0
    %841 = vmatpush1.msra.mxu0 0.0
    %842 = vmatprep.subr.mxu0 0.0
    %843 = vmatpush1.msra.mxu0 0.0
    %844 = vmatprep.subr.mxu0 0.0
    %845 = vmatpush1.msra.mxu0 0.0
    %846 = vmatprep.subr.mxu0 0.0
    %847 = vmatpush1.msra.mxu0 0.0
    %848 = vmatprep.subr.mxu0 0.0
    %849 = vmatpush1.msra.mxu0 0.0
    %850 = vmatprep.subr.mxu0 0.0
    %851 = vmatpush1.msra.mxu0 0.0
    %852 = vmatprep.subr.mxu0 0.0
    %853 = vmatpush1.msra.mxu0 0.0
    %854 = vmatprep.subr.mxu0 0.0
    %855 = vmatpush1.msra.mxu0 0.0
    %856 = vmatprep.subr.mxu0 0.0
    %857 = vmatpush1.msra.mxu0 0.0
    %858 = vmatprep.subr.mxu0 0.0
    %859 = vmatpush1.msra.mxu0 0.0
    %860 = vmatprep.subr.mxu0 0.0
    %861 = vmatpush1.msra.mxu0 0.0
    %862 = vmatprep.mubr.f32.mxu0 0.0
    %863 = vmatmul.mubr.f32.gmra.mrb[0].mxu0 %v795
    %v864 = vpop.f32.mrb[0].mxu0
    %v865 = vadd.f32 %v620, %v864
    %v866 = vpop.f32.mrb[0].mxu0
    %v867 = vadd.f32 %v624, %v866
    %868 = vdwg.mxu0
    %869 = vmatprep.subr.mxu0 0.0
    %870 = vmatpush1.msra.mxu0 %v101
    %871 = vmatprep.subr.mxu0 0.0
    %872 = vmatpush1.msra.mxu0 %v104
    %873 = vmatprep.subr.mxu0 0.0
    %874 = vmatpush1.msra.mxu0 %v107
    %875 = vmatprep.subr.mxu0 0.0
    %876 = vmatpush1.msra.mxu0 %v110
    %877 = vmatprep.subr.mxu0 0.0
    %878 = vmatpush1.msra.mxu0 %v113
    %879 = vmatprep.subr.mxu0 0.0
    %880 = vmatpush1.msra.mxu0 %v116
    %881 = vmatprep.subr.mxu0 0.0
    %882 = vmatpush1.msra.mxu0 %v119
    %883 = vmatprep.subr.mxu0 0.0
    %884 = vmatpush1.msra.mxu0 %v122
    %885 = vmatprep.subr.mxu0 0.0
    %886 = vmatpush1.msra.mxu0 %v125
    %887 = vmatprep.subr.mxu0 0.0
    %888 = vmatpush1.msra.mxu0 %v128
    %889 = vmatprep.subr.mxu0 0.0
    %890 = vmatpush1.msra.mxu0 %v131
    %891 = vmatprep.subr.mxu0 0.0
    %892 = vmatpush1.msra.mxu0 %v134
    %893 = vmatprep.subr.mxu0 0.0
    %894 = vmatpush1.msra.mxu0 %v137
    %895 = vmatprep.subr.mxu0 0.0
    %896 = vmatpush1.msra.mxu0 %v140
    %897 = vmatprep.subr.mxu0 0.0
    %898 = vmatpush1.msra.mxu0 %v143
    %899 = vmatprep.subr.mxu0 0.0
    %900 = vmatpush1.msra.mxu0 %v146
    %901 = vmatprep.subr.mxu0 0.0
    %902 = vmatpush1.msra.mxu0 0.0
    %903 = vmatprep.subr.mxu0 0.0
    %904 = vmatpush1.msra.mxu0 0.0
    %905 = vmatprep.subr.mxu0 0.0
    %906 = vmatpush1.msra.mxu0 0.0
    %907 = vmatprep.subr.mxu0 0.0
    %908 = vmatpush1.msra.mxu0 0.0
    %909 = vmatprep.subr.mxu0 0.0
    %910 = vmatpush1.msra.mxu0 0.0
    %911 = vmatprep.subr.mxu0 0.0
    %912 = vmatpush1.msra.mxu0 0.0
    %913 = vmatprep.subr.mxu0 0.0
    %914 = vmatpush1.msra.mxu0 0.0
    %915 = vmatprep.subr.mxu0 0.0
    %916 = vmatpush1.msra.mxu0 0.0
    %917 = vmatprep.subr.mxu0 0.0
    %918 = vmatpush1.msra.mxu0 0.0
    %919 = vmatprep.subr.mxu0 0.0
    %920 = vmatpush1.msra.mxu0 0.0
    %921 = vmatprep.subr.mxu0 0.0
    %922 = vmatpush1.msra.mxu0 0.0
    %923 = vmatprep.subr.mxu0 0.0
    %924 = vmatpush1.msra.mxu0 0.0
    %925 = vmatprep.subr.mxu0 0.0
    %926 = vmatpush1.msra.mxu0 0.0
    %927 = vmatprep.subr.mxu0 0.0
    %928 = vmatpush1.msra.mxu0 0.0
    %929 = vmatprep.subr.mxu0 0.0
    %930 = vmatpush1.msra.mxu0 0.0
    %931 = vmatprep.subr.mxu0 0.0
    %932 = vmatpush1.msra.mxu0 0.0
    %933 = vmatprep.mubr.f32.mxu0 0.0
    %934 = vmatmul.mubr.f32.gmra.mrb[0].mxu0 %v795
    %v935 = vpop.f32.mrb[0].mxu0
    %v936 = vadd.f32 %v628, %v935
    %v937 = vpop.f32.mrb[0].mxu0
    %938 = vdwg.mxu0
    %v939 = vadd.f32 %v796, %v865
    %v940 = vxor.u32 %v939, 2147483648
    %v941 = vmul.f32 %v940, 1.442695
    %v942 = vpow.pop %v941
    %v943 = vadd.f32 %v942, 1.0
    %v944 = vrcp.pop %v943
    %v945 = vmul.f32 1.0, %v944
    %v947 = vrot.slane %v796, 4
    %v949 = vadd.f32 %v947, %v867
    %v950 = vxor.u32 %v949, 2147483648
    %v951 = vmul.f32 %v950, 1.442695
    %v952 = vpow.pop %v951
    %v953 = vadd.f32 %v952, 1.0
    %v954 = vrcp.pop %v953
    %v955 = vmul.f32 1.0, %v954
    %v956 = vmul.f32 %v945, %v936
    %v957 = vadd.f32 %v797, %v956
    %v958 = vtanh.pop %v957
    %v959 = vsub.f32 %v795, %v958
    %v960 = vmul.f32 %v955, %v959
    %v961 = vadd.f32 %v958, %v960
    %v962 = vld [vmem:[%s610] sm:$0xff]
    %v963 = vld [vmem:[%s610 + $0x8] sm:$0xf]
    %964 = vmatprep.subr.mxu0 %v100
    %965 = vmatpush1.msra.mxu0 %v99
    %966 = vmatprep.subr.mxu0 %v103
    %967 = vmatpush1.msra.mxu0 %v102
    %968 = vmatprep.subr.mxu0 %v106
    %969 = vmatpush1.msra.mxu0 %v105
    %970 = vmatprep.subr.mxu0 %v109
    %971 = vmatpush1.msra.mxu0 %v108
    %972 = vmatprep.subr.mxu0 %v112
    %973 = vmatpush1.msra.mxu0 %v111
    %974 = vmatprep.subr.mxu0 %v115
    %975 = vmatpush1.msra.mxu0 %v114
    %976 = vmatprep.subr.mxu0 %v118
    %977 = vmatpush1.msra.mxu0 %v117
    %978 = vmatprep.subr.mxu0 %v121
    %979 = vmatpush1.msra.mxu0 %v120
    %980 = vmatprep.subr.mxu0 %v124
    %981 = vmatpush1.msra.mxu0 %v123
    %982 = vmatprep.subr.mxu0 %v127
    %983 = vmatpush1.msra.mxu0 %v126
    %984 = vmatprep.subr.mxu0 %v130
    %985 = vmatpush1.msra.mxu0 %v129
    %986 = vmatprep.subr.mxu0 %v133
    %987 = vmatpush1.msra.mxu0 %v132
    %988 = vmatprep.subr.mxu0 %v136
    %989 = vmatpush1.msra.mxu0 %v135
    %990 = vmatprep.subr.mxu0 %v139
    %991 = vmatpush1.msra.mxu0 %v138
    %992 = vmatprep.subr.mxu0 %v142
    %993 = vmatpush1.msra.mxu0 %v141
    %994 = vmatprep.subr.mxu0 %v145
    %995 = vmatpush1.msra.mxu0 %v144
    %996 = vmatprep.subr.mxu0 0.0
    %997 = vmatpush1.msra.mxu0 0.0
    %998 = vmatprep.subr.mxu0 0.0
    %999 = vmatpush1.msra.mxu0 0.0
    %1000 = vmatprep.subr.mxu0 0.0
    %1001 = vmatpush1.msra.mxu0 0.0
    %1002 = vmatprep.subr.mxu0 0.0
    %1003 = vmatpush1.msra.mxu0 0.0
    %1004 = vmatprep.subr.mxu0 0.0
    %1005 = vmatpush1.msra.mxu0 0.0
    %1006 = vmatprep.subr.mxu0 0.0
    %1007 = vmatpush1.msra.mxu0 0.0
    %1008 = vmatprep.subr.mxu0 0.0
    %1009 = vmatpush1.msra.mxu0 0.0
    %1010 = vmatprep.subr.mxu0 0.0
    %1011 = vmatpush1.msra.mxu0 0.0
    %1012 = vmatprep.subr.mxu0 0.0
    %1013 = vmatpush1.msra.mxu0 0.0
    %1014 = vmatprep.subr.mxu0 0.0
    %1015 = vmatpush1.msra.mxu0 0.0
    %1016 = vmatprep.subr.mxu0 0.0
    %1017 = vmatpush1.msra.mxu0 0.0
    %1018 = vmatprep.subr.mxu0 0.0
    %1019 = vmatpush1.msra.mxu0 0.0
    %1020 = vmatprep.subr.mxu0 0.0
    %1021 = vmatpush1.msra.mxu0 0.0
    %1022 = vmatprep.subr.mxu0 0.0
    %1023 = vmatpush1.msra.mxu0 0.0
    %1024 = vmatprep.subr.mxu0 0.0
    %1025 = vmatpush1.msra.mxu0 0.0
    %1026 = vmatprep.subr.mxu0 0.0
    %1027 = vmatpush1.msra.mxu0 0.0
    %1028 = vmatprep.mubr.f32.mxu0 0.0
    %1029 = vmatmul.mubr.f32.gmra.mrb[0].mxu0 %v961
    %v1030 = vpop.f32.mrb[0].mxu0
    %v1031 = vadd.f32 %v620, %v1030
    %v1032 = vpop.f32.mrb[0].mxu0
    %v1033 = vadd.f32 %v624, %v1032
    %1034 = vdwg.mxu0
    %1035 = vmatprep.subr.mxu0 0.0
    %1036 = vmatpush1.msra.mxu0 %v101
    %1037 = vmatprep.subr.mxu0 0.0
    %1038 = vmatpush1.msra.mxu0 %v104
    %1039 = vmatprep.subr.mxu0 0.0
    %1040 = vmatpush1.msra.mxu0 %v107
    %1041 = vmatprep.subr.mxu0 0.0
    %1042 = vmatpush1.msra.mxu0 %v110
    %1043 = vmatprep.subr.mxu0 0.0
    %1044 = vmatpush1.msra.mxu0 %v113
    %1045 = vmatprep.subr.mxu0 0.0
    %1046 = vmatpush1.msra.mxu0 %v116
    %1047 = vmatprep.subr.mxu0 0.0
    %1048 = vmatpush1.msra.mxu0 %v119
    %1049 = vmatprep.subr.mxu0 0.0
    %1050 = vmatpush1.msra.mxu0 %v122
    %1051 = vmatprep.subr.mxu0 0.0
    %1052 = vmatpush1.msra.mxu0 %v125
    %1053 = vmatprep.subr.mxu0 0.0
    %1054 = vmatpush1.msra.mxu0 %v128
    %1055 = vmatprep.subr.mxu0 0.0
    %1056 = vmatpush1.msra.mxu0 %v131
    %1057 = vmatprep.subr.mxu0 0.0
    %1058 = vmatpush1.msra.mxu0 %v134
    %1059 = vmatprep.subr.mxu0 0.0
    %1060 = vmatpush1.msra.mxu0 %v137
    %1061 = vmatprep.subr.mxu0 0.0
    %1062 = vmatpush1.msra.mxu0 %v140
    %1063 = vmatprep.subr.mxu0 0.0
    %1064 = vmatpush1.msra.mxu0 %v143
    %1065 = vmatprep.subr.mxu0 0.0
    %1066 = vmatpush1.msra.mxu0 %v146
    %1067 = vmatprep.subr.mxu0 0.0
    %1068 = vmatpush1.msra.mxu0 0.0
    %1069 = vmatprep.subr.mxu0 0.0
    %1070 = vmatpush1.msra.mxu0 0.0
    %1071 = vmatprep.subr.mxu0 0.0
    %1072 = vmatpush1.msra.mxu0 0.0
    %1073 = vmatprep.subr.mxu0 0.0
    %1074 = vmatpush1.msra.mxu0 0.0
    %1075 = vmatprep.subr.mxu0 0.0
    %1076 = vmatpush1.msra.mxu0 0.0
    %1077 = vmatprep.subr.mxu0 0.0
    %1078 = vmatpush1.msra.mxu0 0.0
    %1079 = vmatprep.subr.mxu0 0.0
    %1080 = vmatpush1.msra.mxu0 0.0
    %1081 = vmatprep.subr.mxu0 0.0
    %1082 = vmatpush1.msra.mxu0 0.0
    %1083 = vmatprep.subr.mxu0 0.0
    %1084 = vmatpush1.msra.mxu0 0.0
    %1085 = vmatprep.subr.mxu0 0.0
    %1086 = vmatpush1.msra.mxu0 0.0
    %1087 = vmatprep.subr.mxu0 0.0
    %1088 = vmatpush1.msra.mxu0 0.0
    %1089 = vmatprep.subr.mxu0 0.0
    %1090 = vmatpush1.msra.mxu0 0.0
    %1091 = vmatprep.subr.mxu0 0.0
    %1092 = vmatpush1.msra.mxu0 0.0
    %1093 = vmatprep.subr.mxu0 0.0
    %1094 = vmatpush1.msra.mxu0 0.0
    %1095 = vmatprep.subr.mxu0 0.0
    %1096 = vmatpush1.msra.mxu0 0.0
    %1097 = vmatprep.subr.mxu0 0.0
    %1098 = vmatpush1.msra.mxu0 0.0
    %1099 = vmatprep.mubr.f32.mxu0 0.0
    %1100 = vmatmul.mubr.f32.gmra.mrb[0].mxu0 %v961
    %v1101 = vpop.f32.mrb[0].mxu0
    %v1102 = vadd.f32 %v628, %v1101
    %v1103 = vpop.f32.mrb[0].mxu0
    %1104 = vdwg.mxu0
    %v1105 = vadd.f32 %v962, %v1031
    %v1106 = vxor.u32 %v1105, 2147483648
    %v1107 = vmul.f32 %v1106, 1.442695
    %v1108 = vpow.pop %v1107
    %v1109 = vadd.f32 %v1108, 1.0
    %v1110 = vrcp.pop %v1109
    %v1111 = vmul.f32 1.0, %v1110
    %v1113 = vrot.slane %v962, 4
    %v1115 = vadd.f32 %v1113, %v1033
    %v1116 = vxor.u32 %v1115, 2147483648
    %v1117 = vmul.f32 %v1116, 1.442695
    %v1118 = vpow.pop %v1117
    %v1119 = vadd.f32 %v1118, 1.0
    %v1120 = vrcp.pop %v1119
    %v1121 = vmul.f32 1.0, %v1120
    %v1122 = vmul.f32 %v1111, %v1102
    %v1123 = vadd.f32 %v963, %v1122
    %v1124 = vtanh.pop %v1123
    %v1125 = vsub.f32 %v961, %v1124
    %v1126 = vmul.f32 %v1121, %v1125
    %v1127 = vadd.f32 %v1124, %v1126
    %1128 = vst [vmem:[%s6] sm:$0xf] %v1127
    // Predicated region
    $region34: #{decoder_forward.2} parent=1 // pred_check
      _
    $region35: #{decoder_forward.2} parent=1 // pred_check_branch
      %1130 = sbr.rel (0) target = $region37
    $region36: #{decoder_forward.2} parent=1 // pred_region
      _
    $region37: #{decoder_forward.2} parent=1 // pred_fallthru
      _
    // Predicated region
    $region38: #{decoder_forward.2} parent=1 // pred_check
      _
    $region39: #{decoder_forward.2} parent=1 // pred_check_branch
      %1132 = sbr.rel (0) target = $region41
    $region40: #{decoder_forward.2} parent=1 // pred_region
      _
    $region41: #{decoder_forward.2} parent=1 // pred_fallthru
      _
    %1133 = vsyncpa [#allocation4], 1
    %1134 = vsyncpa [#allocation6], 1

</llo_original>
